<compile_context>
chip_gen: v6e
topology: v6e:2x2x1
jax: 0.10.0
libtpu: 0.0.40
codegen_flags: <defaults>
</compile_context>

<pallas_src>
import functools

import jax
import jax.numpy as jnp
from jax import lax
from jax.experimental import pallas as pl
from jax.experimental.pallas import tpu as pltpu


def _round_up(x, m):
    return (x + m - 1) // m * m


def _lstm_chunk_kernel(x_ref, wih_ref, whh_ref, b_ref, wout_ref, bout_ref,
                       o_ref, h_sc, c_sc, hs_sc, *, tc, batch, hp):
    """Processes one chunk of `tc` timesteps.

    x_ref   : (tc*batch, I)    time-major rows (row = t*batch + b)
    wih_ref : (I, 4*hp)        gate-padded W_ih^T
    whh_ref : (hp, 4*hp)       gate-padded W_hh^T (padded hidden rows are zero)
    b_ref   : (1, 4*hp)        gate-padded combined bias (b_ih + b_hh)
    wout_ref: (hp, op)         padded W_out^T
    bout_ref: (1, op)          padded b_out
    o_ref   : (tc*batch, op)   output rows for this chunk
    h_sc/c_sc : (batch, hp)    recurrent state (persists across chunks)
    hs_sc   : (tc*batch, hp)   per-step hidden states for this chunk
    """
    n = pl.program_id(0)

    @pl.when(n == 0)
    def _():
        h_sc[...] = jnp.zeros_like(h_sc)
        c_sc[...] = jnp.zeros_like(c_sc)

    # Hoisted input projection: single MXU call for the whole chunk, it has no
    # dependence on the recurrent state.
    gx = (jnp.dot(x_ref[...], wih_ref[...], preferred_element_type=jnp.float32)
          + b_ref[...])                                   # (tc*B, 4*hp)

    h = h_sc[...]                                         # (B, hp)
    c = c_sc[...]                                         # (B, hp)

    # Serial recurrence, fully unrolled (tc is a small static constant).
    # Each gate occupies a full 128-lane group, so the slices/combines below
    # are whole-vreg VPU ops; only h @ W_hh and the gate math are on the
    # serial critical path.
    for t in range(tc):
        gates = gx[t * batch:(t + 1) * batch, :] + jnp.dot(
            h, whh_ref[...], preferred_element_type=jnp.float32)  # (B, 4*hp)
        i_g = jax.nn.sigmoid(gates[:, 0 * hp:1 * hp])
        f_g = jax.nn.sigmoid(gates[:, 1 * hp:2 * hp])
        g_g = jnp.tanh(gates[:, 2 * hp:3 * hp])
        o_g = jax.nn.sigmoid(gates[:, 3 * hp:4 * hp])
        c = f_g * c + i_g * g_g
        h = o_g * jnp.tanh(c)
        hs_sc[t * batch:(t + 1) * batch, :] = h

    h_sc[...] = h
    c_sc[...] = c

    # Hoisted output projection: one matmul + one lane-dense store per chunk.
    y = (jnp.dot(hs_sc[...], wout_ref[...], preferred_element_type=jnp.float32)
         + bout_ref[...])                                 # (tc*B, op)
    o_ref[...] = y.astype(o_ref.dtype)


def lstm_forecaster_pallas(x, w_ih, w_hh, b_ih, b_hh, w_out, b_out, *, chunk=32):
    """x: (B, T, I) float32. Returns (B, T, O) float32 (matches torch module)."""
    B, T, I = x.shape
    H = w_ih.shape[0] // 4
    O = w_out.shape[0]

    HP = _round_up(H, 128)          # lane-aligned hidden (each gate = k*128 lanes)
    OP = _round_up(O, 128)          # lane-dense output store
    Tc = min(T, chunk)
    if T > Tc:
        while (Tc * B) % 8:         # keep chunk rows sublane(8)-aligned when tiling T
            Tc += 1
    Tpad = _round_up(T, Tc)
    n_chunks = Tpad // Tc

    f32 = jnp.float32

    # --- weight prep (once, in XLA): transpose + per-gate zero-padding so each
    # gate occupies its own 128-lane group.  PyTorch gate order (i, f, g, o). ---
    def pad_gate_cols(w_t):  # (K, 4H) -> (K, 4*HP)
        parts = []
        for g in range(4):
            blk = w_t[:, g * H:(g + 1) * H]
            parts.append(jnp.pad(blk, ((0, 0), (0, HP - H))))
        return jnp.concatenate(parts, axis=1)

    wih_p = pad_gate_cols(w_ih.T.astype(f32))                              # (I, 4*HP)
    whh_p = jnp.pad(pad_gate_cols(w_hh.T.astype(f32)), ((0, HP - H), (0, 0)))  # (HP, 4*HP)
    bias_p = pad_gate_cols((b_ih + b_hh).reshape(1, 4 * H).astype(f32))    # (1, 4*HP)
    wout_p = jnp.pad(w_out.T.astype(f32), ((0, HP - H), (0, OP - O)))      # (HP, OP)
    bout_p = jnp.pad(b_out.reshape(1, O).astype(f32), ((0, 0), (0, OP - O)))  # (1, OP)

    # --- input prep: time-major, (t, b) flattened to rows, time padded ---
    x_tm = jnp.transpose(x, (1, 0, 2)).astype(f32)                         # (T, B, I)
    x_tm = jnp.pad(x_tm, ((0, Tpad - T), (0, 0), (0, 0)))
    x_2d = x_tm.reshape(Tpad * B, I)

    kernel = functools.partial(_lstm_chunk_kernel, tc=Tc, batch=B, hp=HP)

    out_2d = pl.pallas_call(
        kernel,
        out_shape=jax.ShapeDtypeStruct((Tpad * B, OP), f32),
        grid_spec=pltpu.PrefetchScalarGridSpec(
            num_scalar_prefetch=0,
            grid=(n_chunks,),
            in_specs=[
                pl.BlockSpec((Tc * B, I), lambda n: (n, 0)),       # x chunk
                pl.BlockSpec((I, 4 * HP), lambda n: (0, 0)),       # W_ih^T (padded)
                pl.BlockSpec((HP, 4 * HP), lambda n: (0, 0)),      # W_hh^T (padded)
                pl.BlockSpec((1, 4 * HP), lambda n: (0, 0)),       # bias (padded)
                pl.BlockSpec((HP, OP), lambda n: (0, 0)),          # W_out^T (padded)
                pl.BlockSpec((1, OP), lambda n: (0, 0)),           # b_out (padded)
            ],
            out_specs=pl.BlockSpec((Tc * B, OP), lambda n: (n, 0)),
            scratch_shapes=[
                pltpu.VMEM((B, HP), f32),        # h state (persists across chunks)
                pltpu.VMEM((B, HP), f32),        # c state
                pltpu.VMEM((Tc * B, HP), f32),   # per-step hidden states of the chunk
            ],
        ),
        compiler_params=pltpu.CompilerParams(
            dimension_semantics=("arbitrary",)),   # recurrence is serial in time
    )(x_2d, wih_p, whh_p, bias_p, wout_p, bout_p)

    out_tm = out_2d.reshape(Tpad, B, OP)[:T, :, :O]    # drop time + lane padding
    return jnp.transpose(out_tm, (1, 0, 2))            # (B, T, O)


def _reference_jax(x, w_ih, w_hh, b_ih, b_hh, w_out, b_out):
    """Pure-JAX LSTM reference matching torch.nn.LSTM semantics."""
    B, T, I = x.shape
    H = w_hh.shape[1]

    def step(carry, x_t):
        h, c = carry
        gates = x_t @ w_ih.T + b_ih + h @ w_hh.T + b_hh
        i = jax.nn.sigmoid(gates[:, 0 * H:1 * H])
        f = jax.nn.sigmoid(gates[:, 1 * H:2 * H])
        g = jnp.tanh(gates[:, 2 * H:3 * H])
        o = jax.nn.sigmoid(gates[:, 3 * H:4 * H])
        c = f * c + i * g
        h = o * jnp.tanh(c)
        return (h, c), h

    h0 = jnp.zeros((B, H), jnp.float32)
    c0 = jnp.zeros((B, H), jnp.float32)
    _, hs = lax.scan(step, (h0, c0), jnp.transpose(x, (1, 0, 2)))
    hs = jnp.transpose(hs, (1, 0, 2))              # (B, T, H)
    return hs @ w_out.T + b_out


if __name__ == "__main__":
    # Shapes consistent with the module's forward:
    #   input_size=16, hidden_size=32, output_size=8, batch=2, seq=8
    B, T, I, H, O = 2, 8, 16, 32, 8

    key = jax.random.PRNGKey(0)
    ks = jax.random.split(key, 7)
    scale = 1.0 / jnp.sqrt(H)
    x = jax.random.normal(ks[0], (B, T, I), jnp.float32)
    w_ih = jax.random.uniform(ks[1], (4 * H, I), jnp.float32, -scale, scale)
    w_hh = jax.random.uniform(ks[2], (4 * H, H), jnp.float32, -scale, scale)
    b_ih = jax.random.uniform(ks[3], (4 * H,), jnp.float32, -scale, scale)
    b_hh = jax.random.uniform(ks[4], (4 * H,), jnp.float32, -scale, scale)
    w_out = jax.random.uniform(ks[5], (O, H), jnp.float32, -scale, scale)
    b_out = jax.random.uniform(ks[6], (O,), jnp.float32, -scale, scale)

    out = lstm_forecaster_pallas(x, w_ih, w_hh, b_ih, b_hh, w_out, b_out)
    out = jax.block_until_ready(out)

    ref = _reference_jax(x, w_ih, w_hh, b_ih, b_hh, w_out, b_out)
    assert out.shape == (B, T, O)
    assert jnp.max(jnp.abs(out - ref)) < 1e-4, "mismatch vs JAX reference"

    print("KERNEL_OK")
</pallas_src>

<mosaic_0001>
module attributes {stable_mosaic.version = 11 : i64} {
  func.func @_lstm_chunk_kernel(%arg0: i32, %arg1: memref<16x16xf32, #tpu.memory_space<vmem>>, %arg2: memref<16x512xf32, #tpu.memory_space<vmem>>, %arg3: memref<128x512xf32, #tpu.memory_space<vmem>>, %arg4: memref<1x512xf32, #tpu.memory_space<vmem>>, %arg5: memref<128x128xf32, #tpu.memory_space<vmem>>, %arg6: memref<1x128xf32, #tpu.memory_space<vmem>>, %arg7: memref<16x128xf32, #tpu.memory_space<vmem>>, %arg8: memref<2x128xf32, #tpu.memory_space<vmem>>, %arg9: memref<2x128xf32, #tpu.memory_space<vmem>>, %arg10: memref<16x128xf32, #tpu.memory_space<vmem>>) attributes {dimension_semantics = [#tpu.dimension_semantics<arbitrary>], iteration_bounds = array<i64: 1>, scalar_prefetch = 0 : i64, scratch_operands = 3 : i64, tpu.core_type = #tpu.core_type<tc>, window_params = [{transform_indices = @transform_0, window_bounds = array<i64: 16, 16>}, {pipeline_mode = #tpu.pipeline_mode<synchronous>, transform_indices = @transform_1, window_bounds = array<i64: 16, 512>}, {pipeline_mode = #tpu.pipeline_mode<synchronous>, transform_indices = @transform_2, window_bounds = array<i64: 128, 512>}, {pipeline_mode = #tpu.pipeline_mode<synchronous>, transform_indices = @transform_3, window_bounds = array<i64: 1, 512>}, {pipeline_mode = #tpu.pipeline_mode<synchronous>, transform_indices = @transform_4, window_bounds = array<i64: 128, 128>}, {pipeline_mode = #tpu.pipeline_mode<synchronous>, transform_indices = @transform_5, window_bounds = array<i64: 1, 128>}, {transform_indices = @transform_6, window_bounds = array<i64: 16, 128>}]} {
    %c0_i32 = arith.constant 0 : i32
    %0 = arith.cmpi eq, %arg0, %c0_i32 : i32
    %1 = arith.extui %0 : i1 to i32
    %c0_i32_0 = arith.constant 0 : i32
    %2 = arith.cmpi ne, %1, %c0_i32_0 : i32
    scf.if %2 {
      %cst_80 = arith.constant 0.000000e+00 : f32
      %260 = vector.broadcast %cst_80 : f32 to vector<2x128xf32>
      %c0_81 = arith.constant 0 : index
      %c0_82 = arith.constant 0 : index
      %261 = vector.load %arg8[%c0_81, %c0_82] : memref<2x128xf32, #tpu.memory_space<vmem>>, vector<2x128xf32>
      tpu.vector_store %arg8[%c0_81, %c0_82], %260 {strides = array<i32>} : memref<2x128xf32, #tpu.memory_space<vmem>>, vector<2x128xf32>,
      %cst_83 = arith.constant 0.000000e+00 : f32
      %262 = vector.broadcast %cst_83 : f32 to vector<2x128xf32>
      %c0_84 = arith.constant 0 : index
      %c0_85 = arith.constant 0 : index
      %263 = vector.load %arg9[%c0_84, %c0_85] : memref<2x128xf32, #tpu.memory_space<vmem>>, vector<2x128xf32>
      tpu.vector_store %arg9[%c0_84, %c0_85], %262 {strides = array<i32>} : memref<2x128xf32, #tpu.memory_space<vmem>>, vector<2x128xf32>,
    } else {
    }
    %c0 = arith.constant 0 : index
    %c0_1 = arith.constant 0 : index
    %3 = vector.load %arg1[%c0, %c0_1] : memref<16x16xf32, #tpu.memory_space<vmem>>, vector<16x16xf32>
    %c0_2 = arith.constant 0 : index
    %c0_3 = arith.constant 0 : index
    %4 = vector.load %arg2[%c0_2, %c0_3] : memref<16x512xf32, #tpu.memory_space<vmem>>, vector<16x512xf32>
    %cst = arith.constant dense<0.000000e+00> : vector<16x512xf32>
    %5 = tpu.matmul %3, %4, %cst {dimension_numbers = #tpu.dot_dimension_numbers<[1], [0], [0], [1], [0, 0, 1, 1], [], []>} : vector<16x16xf32>, vector<16x512xf32>, vector<16x512xf32> -> vector<16x512xf32>
    %c0_4 = arith.constant 0 : index
    %c0_5 = arith.constant 0 : index
    %6 = vector.load %arg4[%c0_4, %c0_5] : memref<1x512xf32, #tpu.memory_space<vmem>>, vector<1x512xf32>
    %7 = vector.broadcast %6 : vector<1x512xf32> to vector<16x512xf32>
    %8 = arith.addf %5, %7 : vector<16x512xf32>
    %c0_6 = arith.constant 0 : index
    %c0_7 = arith.constant 0 : index
    %9 = vector.load %arg8[%c0_6, %c0_7] : memref<2x128xf32, #tpu.memory_space<vmem>>, vector<2x128xf32>
    %c0_8 = arith.constant 0 : index
    %c0_9 = arith.constant 0 : index
    %10 = vector.load %arg9[%c0_8, %c0_9] : memref<2x128xf32, #tpu.memory_space<vmem>>, vector<2x128xf32>
    %11 = vector.extract_strided_slice %8 {offsets = [0, 0], sizes = [2, 512], strides = [1, 1]} : vector<16x512xf32> to vector<2x512xf32>
    %c0_10 = arith.constant 0 : index
    %c0_11 = arith.constant 0 : index
    %12 = vector.load %arg3[%c0_10, %c0_11] : memref<128x512xf32, #tpu.memory_space<vmem>>, vector<128x512xf32>
    %cst_12 = arith.constant dense<0.000000e+00> : vector<2x512xf32>
    %13 = tpu.matmul %9, %12, %cst_12 {dimension_numbers = #tpu.dot_dimension_numbers<[1], [0], [0], [1], [0, 0, 1, 1], [], []>} : vector<2x128xf32>, vector<128x512xf32>, vector<2x512xf32> -> vector<2x512xf32>
    %14 = arith.addf %11, %13 : vector<2x512xf32>
    %15 = vector.extract_strided_slice %14 {offsets = [0, 0], sizes = [2, 128], strides = [1, 1]} : vector<2x512xf32> to vector<2x128xf32>
    %16 = arith.negf %15 : vector<2x128xf32>
    %17 = math.exp %16 : vector<2x128xf32>
    %cst_13 = arith.constant 1.000000e+00 : f32
    %18 = vector.broadcast %cst_13 : f32 to vector<2x128xf32>
    %19 = arith.addf %18, %17 : vector<2x128xf32>
    %20 = arith.divf %18, %19 : vector<2x128xf32>
    %21 = vector.extract_strided_slice %14 {offsets = [0, 128], sizes = [2, 128], strides = [1, 1]} : vector<2x512xf32> to vector<2x128xf32>
    %22 = arith.negf %21 : vector<2x128xf32>
    %23 = math.exp %22 : vector<2x128xf32>
    %cst_14 = arith.constant 1.000000e+00 : f32
    %24 = vector.broadcast %cst_14 : f32 to vector<2x128xf32>
    %25 = arith.addf %24, %23 : vector<2x128xf32>
    %26 = arith.divf %24, %25 : vector<2x128xf32>
    %27 = vector.extract_strided_slice %14 {offsets = [0, 256], sizes = [2, 128], strides = [1, 1]} : vector<2x512xf32> to vector<2x128xf32>
    %28 = math.tanh %27 : vector<2x128xf32>
    %29 = vector.extract_strided_slice %14 {offsets = [0, 384], sizes = [2, 128], strides = [1, 1]} : vector<2x512xf32> to vector<2x128xf32>
    %30 = arith.negf %29 : vector<2x128xf32>
    %31 = math.exp %30 : vector<2x128xf32>
    %cst_15 = arith.constant 1.000000e+00 : f32
    %32 = vector.broadcast %cst_15 : f32 to vector<2x128xf32>
    %33 = arith.addf %32, %31 : vector<2x128xf32>
    %34 = arith.divf %32, %33 : vector<2x128xf32>
    %35 = arith.mulf %26, %10 : vector<2x128xf32>
    %36 = arith.mulf %20, %28 : vector<2x128xf32>
    %37 = arith.addf %35, %36 : vector<2x128xf32>
    %38 = math.tanh %37 : vector<2x128xf32>
    %39 = arith.mulf %34, %38 : vector<2x128xf32>
    %c0_16 = arith.constant 0 : index
    %c0_17 = arith.constant 0 : index
    %40 = vector.load %arg10[%c0_16, %c0_17] : memref<16x128xf32, #tpu.memory_space<vmem>>, vector<2x128xf32>
    tpu.vector_store %arg10[%c0_16, %c0_17], %39 {strides = array<i32>} : memref<16x128xf32, #tpu.memory_space<vmem>>, vector<2x128xf32>,
    %41 = vector.extract_strided_slice %8 {offsets = [2, 0], sizes = [2, 512], strides = [1, 1]} : vector<16x512xf32> to vector<2x512xf32>
    %c0_18 = arith.constant 0 : index
    %c0_19 = arith.constant 0 : index
    %42 = vector.load %arg3[%c0_18, %c0_19] : memref<128x512xf32, #tpu.memory_space<vmem>>, vector<128x512xf32>
    %cst_20 = arith.constant dense<0.000000e+00> : vector<2x512xf32>
    %43 = tpu.matmul %39, %42, %cst_20 {dimension_numbers = #tpu.dot_dimension_numbers<[1], [0], [0], [1], [0, 0, 1, 1], [], []>} : vector<2x128xf32>, vector<128x512xf32>, vector<2x512xf32> -> vector<2x512xf32>
    %44 = arith.addf %41, %43 : vector<2x512xf32>
    %45 = vector.extract_strided_slice %44 {offsets = [0, 0], sizes = [2, 128], strides = [1, 1]} : vector<2x512xf32> to vector<2x128xf32>
    %46 = arith.negf %45 : vector<2x128xf32>
    %47 = math.exp %46 : vector<2x128xf32>
    %cst_21 = arith.constant 1.000000e+00 : f32
    %48 = vector.broadcast %cst_21 : f32 to vector<2x128xf32>
    %49 = arith.addf %48, %47 : vector<2x128xf32>
    %50 = arith.divf %48, %49 : vector<2x128xf32>
    %51 = vector.extract_strided_slice %44 {offsets = [0, 128], sizes = [2, 128], strides = [1, 1]} : vector<2x512xf32> to vector<2x128xf32>
    %52 = arith.negf %51 : vector<2x128xf32>
    %53 = math.exp %52 : vector<2x128xf32>
    %cst_22 = arith.constant 1.000000e+00 : f32
    %54 = vector.broadcast %cst_22 : f32 to vector<2x128xf32>
    %55 = arith.addf %54, %53 : vector<2x128xf32>
    %56 = arith.divf %54, %55 : vector<2x128xf32>
    %57 = vector.extract_strided_slice %44 {offsets = [0, 256], sizes = [2, 128], strides = [1, 1]} : vector<2x512xf32> to vector<2x128xf32>
    %58 = math.tanh %57 : vector<2x128xf32>
    %59 = vector.extract_strided_slice %44 {offsets = [0, 384], sizes = [2, 128], strides = [1, 1]} : vector<2x512xf32> to vector<2x128xf32>
    %60 = arith.negf %59 : vector<2x128xf32>
    %61 = math.exp %60 : vector<2x128xf32>
    %cst_23 = arith.constant 1.000000e+00 : f32
    %62 = vector.broadcast %cst_23 : f32 to vector<2x128xf32>
    %63 = arith.addf %62, %61 : vector<2x128xf32>
    %64 = arith.divf %62, %63 : vector<2x128xf32>
    %65 = arith.mulf %56, %37 : vector<2x128xf32>
    %66 = arith.mulf %50, %58 : vector<2x128xf32>
    %67 = arith.addf %65, %66 : vector<2x128xf32>
    %68 = math.tanh %67 : vector<2x128xf32>
    %69 = arith.mulf %64, %68 : vector<2x128xf32>
    %c2 = arith.constant 2 : index
    %c0_24 = arith.constant 0 : index
    %70 = vector.load %arg10[%c2, %c0_24] : memref<16x128xf32, #tpu.memory_space<vmem>>, vector<2x128xf32>
    tpu.vector_store %arg10[%c2, %c0_24], %69 {strides = array<i32>} : memref<16x128xf32, #tpu.memory_space<vmem>>, vector<2x128xf32>,
    %71 = vector.extract_strided_slice %8 {offsets = [4, 0], sizes = [2, 512], strides = [1, 1]} : vector<16x512xf32> to vector<2x512xf32>
    %c0_25 = arith.constant 0 : index
    %c0_26 = arith.constant 0 : index
    %72 = vector.load %arg3[%c0_25, %c0_26] : memref<128x512xf32, #tpu.memory_space<vmem>>, vector<128x512xf32>
    %cst_27 = arith.constant dense<0.000000e+00> : vector<2x512xf32>
    %73 = tpu.matmul %69, %72, %cst_27 {dimension_numbers = #tpu.dot_dimension_numbers<[1], [0], [0], [1], [0, 0, 1, 1], [], []>} : vector<2x128xf32>, vector<128x512xf32>, vector<2x512xf32> -> vector<2x512xf32>
    %74 = arith.addf %71, %73 : vector<2x512xf32>
    %75 = vector.extract_strided_slice %74 {offsets = [0, 0], sizes = [2, 128], strides = [1, 1]} : vector<2x512xf32> to vector<2x128xf32>
    %76 = arith.negf %75 : vector<2x128xf32>
    %77 = math.exp %76 : vector<2x128xf32>
    %cst_28 = arith.constant 1.000000e+00 : f32
    %78 = vector.broadcast %cst_28 : f32 to vector<2x128xf32>
    %79 = arith.addf %78, %77 : vector<2x128xf32>
    %80 = arith.divf %78, %79 : vector<2x128xf32>
    %81 = vector.extract_strided_slice %74 {offsets = [0, 128], sizes = [2, 128], strides = [1, 1]} : vector<2x512xf32> to vector<2x128xf32>
    %82 = arith.negf %81 : vector<2x128xf32>
    %83 = math.exp %82 : vector<2x128xf32>
    %cst_29 = arith.constant 1.000000e+00 : f32
    %84 = vector.broadcast %cst_29 : f32 to vector<2x128xf32>
    %85 = arith.addf %84, %83 : vector<2x128xf32>
    %86 = arith.divf %84, %85 : vector<2x128xf32>
    %87 = vector.extract_strided_slice %74 {offsets = [0, 256], sizes = [2, 128], strides = [1, 1]} : vector<2x512xf32> to vector<2x128xf32>
    %88 = math.tanh %87 : vector<2x128xf32>
    %89 = vector.extract_strided_slice %74 {offsets = [0, 384], sizes = [2, 128], strides = [1, 1]} : vector<2x512xf32> to vector<2x128xf32>
    %90 = arith.negf %89 : vector<2x128xf32>
    %91 = math.exp %90 : vector<2x128xf32>
    %cst_30 = arith.constant 1.000000e+00 : f32
    %92 = vector.broadcast %cst_30 : f32 to vector<2x128xf32>
    %93 = arith.addf %92, %91 : vector<2x128xf32>
    %94 = arith.divf %92, %93 : vector<2x128xf32>
    %95 = arith.mulf %86, %67 : vector<2x128xf32>
    %96 = arith.mulf %80, %88 : vector<2x128xf32>
    %97 = arith.addf %95, %96 : vector<2x128xf32>
    %98 = math.tanh %97 : vector<2x128xf32>
    %99 = arith.mulf %94, %98 : vector<2x128xf32>
    %c4 = arith.constant 4 : index
    %c0_31 = arith.constant 0 : index
    %100 = vector.load %arg10[%c4, %c0_31] : memref<16x128xf32, #tpu.memory_space<vmem>>, vector<2x128xf32>
    tpu.vector_store %arg10[%c4, %c0_31], %99 {strides = array<i32>} : memref<16x128xf32, #tpu.memory_space<vmem>>, vector<2x128xf32>,
    %101 = vector.extract_strided_slice %8 {offsets = [6, 0], sizes = [2, 512], strides = [1, 1]} : vector<16x512xf32> to vector<2x512xf32>
    %c0_32 = arith.constant 0 : index
    %c0_33 = arith.constant 0 : index
    %102 = vector.load %arg3[%c0_32, %c0_33] : memref<128x512xf32, #tpu.memory_space<vmem>>, vector<128x512xf32>
    %cst_34 = arith.constant dense<0.000000e+00> : vector<2x512xf32>
    %103 = tpu.matmul %99, %102, %cst_34 {dimension_numbers = #tpu.dot_dimension_numbers<[1], [0], [0], [1], [0, 0, 1, 1], [], []>} : vector<2x128xf32>, vector<128x512xf32>, vector<2x512xf32> -> vector<2x512xf32>
    %104 = arith.addf %101, %103 : vector<2x512xf32>
    %105 = vector.extract_strided_slice %104 {offsets = [0, 0], sizes = [2, 128], strides = [1, 1]} : vector<2x512xf32> to vector<2x128xf32>
    %106 = arith.negf %105 : vector<2x128xf32>
    %107 = math.exp %106 : vector<2x128xf32>
    %cst_35 = arith.constant 1.000000e+00 : f32
    %108 = vector.broadcast %cst_35 : f32 to vector<2x128xf32>
    %109 = arith.addf %108, %107 : vector<2x128xf32>
    %110 = arith.divf %108, %109 : vector<2x128xf32>
    %111 = vector.extract_strided_slice %104 {offsets = [0, 128], sizes = [2, 128], strides = [1, 1]} : vector<2x512xf32> to vector<2x128xf32>
    %112 = arith.negf %111 : vector<2x128xf32>
    %113 = math.exp %112 : vector<2x128xf32>
    %cst_36 = arith.constant 1.000000e+00 : f32
    %114 = vector.broadcast %cst_36 : f32 to vector<2x128xf32>
    %115 = arith.addf %114, %113 : vector<2x128xf32>
    %116 = arith.divf %114, %115 : vector<2x128xf32>
    %117 = vector.extract_strided_slice %104 {offsets = [0, 256], sizes = [2, 128], strides = [1, 1]} : vector<2x512xf32> to vector<2x128xf32>
    %118 = math.tanh %117 : vector<2x128xf32>
    %119 = vector.extract_strided_slice %104 {offsets = [0, 384], sizes = [2, 128], strides = [1, 1]} : vector<2x512xf32> to vector<2x128xf32>
    %120 = arith.negf %119 : vector<2x128xf32>
    %121 = math.exp %120 : vector<2x128xf32>
    %cst_37 = arith.constant 1.000000e+00 : f32
    %122 = vector.broadcast %cst_37 : f32 to vector<2x128xf32>
    %123 = arith.addf %122, %121 : vector<2x128xf32>
    %124 = arith.divf %122, %123 : vector<2x128xf32>
    %125 = arith.mulf %116, %97 : vector<2x128xf32>
    %126 = arith.mulf %110, %118 : vector<2x128xf32>
    %127 = arith.addf %125, %126 : vector<2x128xf32>
    %128 = math.tanh %127 : vector<2x128xf32>
    %129 = arith.mulf %124, %128 : vector<2x128xf32>
    %c6 = arith.constant 6 : index
    %c0_38 = arith.constant 0 : index
    %130 = vector.load %arg10[%c6, %c0_38] : memref<16x128xf32, #tpu.memory_space<vmem>>, vector<2x128xf32>
    tpu.vector_store %arg10[%c6, %c0_38], %129 {strides = array<i32>} : memref<16x128xf32, #tpu.memory_space<vmem>>, vector<2x128xf32>,
    %131 = vector.extract_strided_slice %8 {offsets = [8, 0], sizes = [2, 512], strides = [1, 1]} : vector<16x512xf32> to vector<2x512xf32>
    %c0_39 = arith.constant 0 : index
    %c0_40 = arith.constant 0 : index
    %132 = vector.load %arg3[%c0_39, %c0_40] : memref<128x512xf32, #tpu.memory_space<vmem>>, vector<128x512xf32>
    %cst_41 = arith.constant dense<0.000000e+00> : vector<2x512xf32>
    %133 = tpu.matmul %129, %132, %cst_41 {dimension_numbers = #tpu.dot_dimension_numbers<[1], [0], [0], [1], [0, 0, 1, 1], [], []>} : vector<2x128xf32>, vector<128x512xf32>, vector<2x512xf32> -> vector<2x512xf32>
    %134 = arith.addf %131, %133 : vector<2x512xf32>
    %135 = vector.extract_strided_slice %134 {offsets = [0, 0], sizes = [2, 128], strides = [1, 1]} : vector<2x512xf32> to vector<2x128xf32>
    %136 = arith.negf %135 : vector<2x128xf32>
    %137 = math.exp %136 : vector<2x128xf32>
    %cst_42 = arith.constant 1.000000e+00 : f32
    %138 = vector.broadcast %cst_42 : f32 to vector<2x128xf32>
    %139 = arith.addf %138, %137 : vector<2x128xf32>
    %140 = arith.divf %138, %139 : vector<2x128xf32>
    %141 = vector.extract_strided_slice %134 {offsets = [0, 128], sizes = [2, 128], strides = [1, 1]} : vector<2x512xf32> to vector<2x128xf32>
    %142 = arith.negf %141 : vector<2x128xf32>
    %143 = math.exp %142 : vector<2x128xf32>
    %cst_43 = arith.constant 1.000000e+00 : f32
    %144 = vector.broadcast %cst_43 : f32 to vector<2x128xf32>
    %145 = arith.addf %144, %143 : vector<2x128xf32>
    %146 = arith.divf %144, %145 : vector<2x128xf32>
    %147 = vector.extract_strided_slice %134 {offsets = [0, 256], sizes = [2, 128], strides = [1, 1]} : vector<2x512xf32> to vector<2x128xf32>
    %148 = math.tanh %147 : vector<2x128xf32>
    %149 = vector.extract_strided_slice %134 {offsets = [0, 384], sizes = [2, 128], strides = [1, 1]} : vector<2x512xf32> to vector<2x128xf32>
    %150 = arith.negf %149 : vector<2x128xf32>
    %151 = math.exp %150 : vector<2x128xf32>
    %cst_44 = arith.constant 1.000000e+00 : f32
    %152 = vector.broadcast %cst_44 : f32 to vector<2x128xf32>
    %153 = arith.addf %152, %151 : vector<2x128xf32>
    %154 = arith.divf %152, %153 : vector<2x128xf32>
    %155 = arith.mulf %146, %127 : vector<2x128xf32>
    %156 = arith.mulf %140, %148 : vector<2x128xf32>
    %157 = arith.addf %155, %156 : vector<2x128xf32>
    %158 = math.tanh %157 : vector<2x128xf32>
    %159 = arith.mulf %154, %158 : vector<2x128xf32>
    %c8 = arith.constant 8 : index
    %c0_45 = arith.constant 0 : index
    %160 = vector.load %arg10[%c8, %c0_45] : memref<16x128xf32, #tpu.memory_space<vmem>>, vector<2x128xf32>
    tpu.vector_store %arg10[%c8, %c0_45], %159 {strides = array<i32>} : memref<16x128xf32, #tpu.memory_space<vmem>>, vector<2x128xf32>,
    %161 = vector.extract_strided_slice %8 {offsets = [10, 0], sizes = [2, 512], strides = [1, 1]} : vector<16x512xf32> to vector<2x512xf32>
    %c0_46 = arith.constant 0 : index
    %c0_47 = arith.constant 0 : index
    %162 = vector.load %arg3[%c0_46, %c0_47] : memref<128x512xf32, #tpu.memory_space<vmem>>, vector<128x512xf32>
    %cst_48 = arith.constant dense<0.000000e+00> : vector<2x512xf32>
    %163 = tpu.matmul %159, %162, %cst_48 {dimension_numbers = #tpu.dot_dimension_numbers<[1], [0], [0], [1], [0, 0, 1, 1], [], []>} : vector<2x128xf32>, vector<128x512xf32>, vector<2x512xf32> -> vector<2x512xf32>
    %164 = arith.addf %161, %163 : vector<2x512xf32>
    %165 = vector.extract_strided_slice %164 {offsets = [0, 0], sizes = [2, 128], strides = [1, 1]} : vector<2x512xf32> to vector<2x128xf32>
    %166 = arith.negf %165 : vector<2x128xf32>
    %167 = math.exp %166 : vector<2x128xf32>
    %cst_49 = arith.constant 1.000000e+00 : f32
    %168 = vector.broadcast %cst_49 : f32 to vector<2x128xf32>
    %169 = arith.addf %168, %167 : vector<2x128xf32>
    %170 = arith.divf %168, %169 : vector<2x128xf32>
    %171 = vector.extract_strided_slice %164 {offsets = [0, 128], sizes = [2, 128], strides = [1, 1]} : vector<2x512xf32> to vector<2x128xf32>
    %172 = arith.negf %171 : vector<2x128xf32>
    %173 = math.exp %172 : vector<2x128xf32>
    %cst_50 = arith.constant 1.000000e+00 : f32
    %174 = vector.broadcast %cst_50 : f32 to vector<2x128xf32>
    %175 = arith.addf %174, %173 : vector<2x128xf32>
    %176 = arith.divf %174, %175 : vector<2x128xf32>
    %177 = vector.extract_strided_slice %164 {offsets = [0, 256], sizes = [2, 128], strides = [1, 1]} : vector<2x512xf32> to vector<2x128xf32>
    %178 = math.tanh %177 : vector<2x128xf32>
    %179 = vector.extract_strided_slice %164 {offsets = [0, 384], sizes = [2, 128], strides = [1, 1]} : vector<2x512xf32> to vector<2x128xf32>
    %180 = arith.negf %179 : vector<2x128xf32>
    %181 = math.exp %180 : vector<2x128xf32>
    %cst_51 = arith.constant 1.000000e+00 : f32
    %182 = vector.broadcast %cst_51 : f32 to vector<2x128xf32>
    %183 = arith.addf %182, %181 : vector<2x128xf32>
    %184 = arith.divf %182, %183 : vector<2x128xf32>
    %185 = arith.mulf %176, %157 : vector<2x128xf32>
    %186 = arith.mulf %170, %178 : vector<2x128xf32>
    %187 = arith.addf %185, %186 : vector<2x128xf32>
    %188 = math.tanh %187 : vector<2x128xf32>
    %189 = arith.mulf %184, %188 : vector<2x128xf32>
    %c10 = arith.constant 10 : index
    %c0_52 = arith.constant 0 : index
    %190 = vector.load %arg10[%c10, %c0_52] : memref<16x128xf32, #tpu.memory_space<vmem>>, vector<2x128xf32>
    tpu.vector_store %arg10[%c10, %c0_52], %189 {strides = array<i32>} : memref<16x128xf32, #tpu.memory_space<vmem>>, vector<2x128xf32>,
    %191 = vector.extract_strided_slice %8 {offsets = [12, 0], sizes = [2, 512], strides = [1, 1]} : vector<16x512xf32> to vector<2x512xf32>
    %c0_53 = arith.constant 0 : index
    %c0_54 = arith.constant 0 : index
    %192 = vector.load %arg3[%c0_53, %c0_54] : memref<128x512xf32, #tpu.memory_space<vmem>>, vector<128x512xf32>
    %cst_55 = arith.constant dense<0.000000e+00> : vector<2x512xf32>
    %193 = tpu.matmul %189, %192, %cst_55 {dimension_numbers = #tpu.dot_dimension_numbers<[1], [0], [0], [1], [0, 0, 1, 1], [], []>} : vector<2x128xf32>, vector<128x512xf32>, vector<2x512xf32> -> vector<2x512xf32>
    %194 = arith.addf %191, %193 : vector<2x512xf32>
    %195 = vector.extract_strided_slice %194 {offsets = [0, 0], sizes = [2, 128], strides = [1, 1]} : vector<2x512xf32> to vector<2x128xf32>
    %196 = arith.negf %195 : vector<2x128xf32>
    %197 = math.exp %196 : vector<2x128xf32>
    %cst_56 = arith.constant 1.000000e+00 : f32
    %198 = vector.broadcast %cst_56 : f32 to vector<2x128xf32>
    %199 = arith.addf %198, %197 : vector<2x128xf32>
    %200 = arith.divf %198, %199 : vector<2x128xf32>
    %201 = vector.extract_strided_slice %194 {offsets = [0, 128], sizes = [2, 128], strides = [1, 1]} : vector<2x512xf32> to vector<2x128xf32>
    %202 = arith.negf %201 : vector<2x128xf32>
    %203 = math.exp %202 : vector<2x128xf32>
    %cst_57 = arith.constant 1.000000e+00 : f32
    %204 = vector.broadcast %cst_57 : f32 to vector<2x128xf32>
    %205 = arith.addf %204, %203 : vector<2x128xf32>
    %206 = arith.divf %204, %205 : vector<2x128xf32>
    %207 = vector.extract_strided_slice %194 {offsets = [0, 256], sizes = [2, 128], strides = [1, 1]} : vector<2x512xf32> to vector<2x128xf32>
    %208 = math.tanh %207 : vector<2x128xf32>
    %209 = vector.extract_strided_slice %194 {offsets = [0, 384], sizes = [2, 128], strides = [1, 1]} : vector<2x512xf32> to vector<2x128xf32>
    %210 = arith.negf %209 : vector<2x128xf32>
    %211 = math.exp %210 : vector<2x128xf32>
    %cst_58 = arith.constant 1.000000e+00 : f32
    %212 = vector.broadcast %cst_58 : f32 to vector<2x128xf32>
    %213 = arith.addf %212, %211 : vector<2x128xf32>
    %214 = arith.divf %212, %213 : vector<2x128xf32>
    %215 = arith.mulf %206, %187 : vector<2x128xf32>
    %216 = arith.mulf %200, %208 : vector<2x128xf32>
    %217 = arith.addf %215, %216 : vector<2x128xf32>
    %218 = math.tanh %217 : vector<2x128xf32>
    %219 = arith.mulf %214, %218 : vector<2x128xf32>
    %c12 = arith.constant 12 : index
    %c0_59 = arith.constant 0 : index
    %220 = vector.load %arg10[%c12, %c0_59] : memref<16x128xf32, #tpu.memory_space<vmem>>, vector<2x128xf32>
    tpu.vector_store %arg10[%c12, %c0_59], %219 {strides = array<i32>} : memref<16x128xf32, #tpu.memory_space<vmem>>, vector<2x128xf32>,
    %221 = vector.extract_strided_slice %8 {offsets = [14, 0], sizes = [2, 512], strides = [1, 1]} : vector<16x512xf32> to vector<2x512xf32>
    %c0_60 = arith.constant 0 : index
    %c0_61 = arith.constant 0 : index
    %222 = vector.load %arg3[%c0_60, %c0_61] : memref<128x512xf32, #tpu.memory_space<vmem>>, vector<128x512xf32>
    %cst_62 = arith.constant dense<0.000000e+00> : vector<2x512xf32>
    %223 = tpu.matmul %219, %222, %cst_62 {dimension_numbers = #tpu.dot_dimension_numbers<[1], [0], [0], [1], [0, 0, 1, 1], [], []>} : vector<2x128xf32>, vector<128x512xf32>, vector<2x512xf32> -> vector<2x512xf32>
    %224 = arith.addf %221, %223 : vector<2x512xf32>
    %225 = vector.extract_strided_slice %224 {offsets = [0, 0], sizes = [2, 128], strides = [1, 1]} : vector<2x512xf32> to vector<2x128xf32>
    %226 = arith.negf %225 : vector<2x128xf32>
    %227 = math.exp %226 : vector<2x128xf32>
    %cst_63 = arith.constant 1.000000e+00 : f32
    %228 = vector.broadcast %cst_63 : f32 to vector<2x128xf32>
    %229 = arith.addf %228, %227 : vector<2x128xf32>
    %230 = arith.divf %228, %229 : vector<2x128xf32>
    %231 = vector.extract_strided_slice %224 {offsets = [0, 128], sizes = [2, 128], strides = [1, 1]} : vector<2x512xf32> to vector<2x128xf32>
    %232 = arith.negf %231 : vector<2x128xf32>
    %233 = math.exp %232 : vector<2x128xf32>
    %cst_64 = arith.constant 1.000000e+00 : f32
    %234 = vector.broadcast %cst_64 : f32 to vector<2x128xf32>
    %235 = arith.addf %234, %233 : vector<2x128xf32>
    %236 = arith.divf %234, %235 : vector<2x128xf32>
    %237 = vector.extract_strided_slice %224 {offsets = [0, 256], sizes = [2, 128], strides = [1, 1]} : vector<2x512xf32> to vector<2x128xf32>
    %238 = math.tanh %237 : vector<2x128xf32>
    %239 = vector.extract_strided_slice %224 {offsets = [0, 384], sizes = [2, 128], strides = [1, 1]} : vector<2x512xf32> to vector<2x128xf32>
    %240 = arith.negf %239 : vector<2x128xf32>
    %241 = math.exp %240 : vector<2x128xf32>
    %cst_65 = arith.constant 1.000000e+00 : f32
    %242 = vector.broadcast %cst_65 : f32 to vector<2x128xf32>
    %243 = arith.addf %242, %241 : vector<2x128xf32>
    %244 = arith.divf %242, %243 : vector<2x128xf32>
    %245 = arith.mulf %236, %217 : vector<2x128xf32>
    %246 = arith.mulf %230, %238 : vector<2x128xf32>
    %247 = arith.addf %245, %246 : vector<2x128xf32>
    %248 = math.tanh %247 : vector<2x128xf32>
    %249 = arith.mulf %244, %248 : vector<2x128xf32>
    %c14 = arith.constant 14 : index
    %c0_66 = arith.constant 0 : index
    %250 = vector.load %arg10[%c14, %c0_66] : memref<16x128xf32, #tpu.memory_space<vmem>>, vector<2x128xf32>
    tpu.vector_store %arg10[%c14, %c0_66], %249 {strides = array<i32>} : memref<16x128xf32, #tpu.memory_space<vmem>>, vector<2x128xf32>,
    %c0_67 = arith.constant 0 : index
    %c0_68 = arith.constant 0 : index
    %251 = vector.load %arg8[%c0_67, %c0_68] : memref<2x128xf32, #tpu.memory_space<vmem>>, vector<2x128xf32>
    tpu.vector_store %arg8[%c0_67, %c0_68], %249 {strides = array<i32>} : memref<2x128xf32, #tpu.memory_space<vmem>>, vector<2x128xf32>,
    %c0_69 = arith.constant 0 : index
    %c0_70 = arith.constant 0 : index
    %252 = vector.load %arg9[%c0_69, %c0_70] : memref<2x128xf32, #tpu.memory_space<vmem>>, vector<2x128xf32>
    tpu.vector_store %arg9[%c0_69, %c0_70], %247 {strides = array<i32>} : memref<2x128xf32, #tpu.memory_space<vmem>>, vector<2x128xf32>,
    %c0_71 = arith.constant 0 : index
    %c0_72 = arith.constant 0 : index
    %253 = vector.load %arg10[%c0_71, %c0_72] : memref<16x128xf32, #tpu.memory_space<vmem>>, vector<16x128xf32>
    %c0_73 = arith.constant 0 : index
    %c0_74 = arith.constant 0 : index
    %254 = vector.load %arg5[%c0_73, %c0_74] : memref<128x128xf32, #tpu.memory_space<vmem>>, vector<128x128xf32>
    %cst_75 = arith.constant dense<0.000000e+00> : vector<16x128xf32>
    %255 = tpu.matmul %253, %254, %cst_75 {dimension_numbers = #tpu.dot_dimension_numbers<[1], [0], [0], [1], [0, 0, 1, 1], [], []>} : vector<16x128xf32>, vector<128x128xf32>, vector<16x128xf32> -> vector<16x128xf32>
    %c0_76 = arith.constant 0 : index
    %c0_77 = arith.constant 0 : index
    %256 = vector.load %arg6[%c0_76, %c0_77] : memref<1x128xf32, #tpu.memory_space<vmem>>, vector<1x128xf32>
    %257 = vector.broadcast %256 : vector<1x128xf32> to vector<16x128xf32>
    %258 = arith.addf %255, %257 : vector<16x128xf32>
    %c0_78 = arith.constant 0 : index
    %c0_79 = arith.constant 0 : index
    %259 = vector.load %arg7[%c0_78, %c0_79] : memref<16x128xf32, #tpu.memory_space<vmem>>, vector<16x128xf32>
    tpu.vector_store %arg7[%c0_78, %c0_79], %258 {strides = array<i32>} : memref<16x128xf32, #tpu.memory_space<vmem>>, vector<16x128xf32>,
    return
  }
  func.func @transform_0(%arg0: i32) -> (i32, i32) {
    %c0_i32 = arith.constant 0 : i32
    %c0_i32_0 = arith.constant 0 : i32
    return %arg0, %c0_i32 : i32, i32
  }
  func.func @transform_1(%arg0: i32) -> (i32, i32) {
    %c0_i32 = arith.constant 0 : i32
    %c0_i32_0 = arith.constant 0 : i32
    %c0_i32_1 = arith.constant 0 : i32
    return %c0_i32, %c0_i32_0 : i32, i32
  }
  func.func @transform_2(%arg0: i32) -> (i32, i32) {
    %c0_i32 = arith.constant 0 : i32
    %c0_i32_0 = arith.constant 0 : i32
    %c0_i32_1 = arith.constant 0 : i32
    return %c0_i32, %c0_i32_0 : i32, i32
  }
  func.func @transform_3(%arg0: i32) -> (i32, i32) {
    %c0_i32 = arith.constant 0 : i32
    %c0_i32_0 = arith.constant 0 : i32
    %c0_i32_1 = arith.constant 0 : i32
    return %c0_i32, %c0_i32_0 : i32, i32
  }
  func.func @transform_4(%arg0: i32) -> (i32, i32) {
    %c0_i32 = arith.constant 0 : i32
    %c0_i32_0 = arith.constant 0 : i32
    %c0_i32_1 = arith.constant 0 : i32
    return %c0_i32, %c0_i32_0 : i32, i32
  }
  func.func @transform_5(%arg0: i32) -> (i32, i32) {
    %c0_i32 = arith.constant 0 : i32
    %c0_i32_0 = arith.constant 0 : i32
    %c0_i32_1 = arith.constant 0 : i32
    return %c0_i32, %c0_i32_0 : i32, i32
  }
  func.func @transform_6(%arg0: i32) -> (i32, i32) {
    %c0_i32 = arith.constant 0 : i32
    %c0_i32_0 = arith.constant 0 : i32
    return %arg0, %c0_i32 : i32, i32
  }
}

</mosaic_0001>

<llo_original>
// kernel: tpu_custom_call.1
$region0: #{tpu_custom_call.1}
  #allocation0 [shape = 'u32[]', space=smem, size = 0x4, offset = 0x4, fixed_abs, tag = 'smem constant byte address 0x4 - core index']
  #allocation1 [shape = 'u32[144,128]{1,0:T(1,128)}', space=vmem, size = 0x12000, scoped, tag = 'internal scratch']
  #allocation2 [shape = 'f32[2,128]{1,0:T(2,128)}', space=vmem, size = 0x400, scoped, tag = 'scratch operand']
  #allocation3 [shape = 'f32[2,128]{1,0:T(2,128)}', space=vmem, size = 0x400, scoped, tag = 'scratch operand']
  #allocation4 [shape = 'f32[16,128]{1,0:T(8,128)}', space=vmem, size = 0x2000, scoped, tag = 'scratch operand']
  %s0 = inlined_call_operand.hbm [shape: f32[16,16], index: 0, kind: input, shape index: {}]
  %s1 = inlined_call_operand.hbm [shape: f32[16,512], index: 1, kind: input, shape index: {}]
  %s2 = inlined_call_operand.hbm [shape: f32[128,512], index: 2, kind: input, shape index: {}]
  %s3 = inlined_call_operand.vmem [shape: f32[1,512], index: 3, kind: input, shape index: {}]
  %s4 = inlined_call_operand.hbm [shape: f32[128,128], index: 4, kind: input, shape index: {}]
  %s5 = inlined_call_operand.vmem [shape: f32[1,128], index: 5, kind: input, shape index: {}]
  %s6 = inlined_call_operand.hbm [shape: f32[16,128], index: 6, kind: output, shape index: {}]
  %s7 = sld [smem:[#allocation0]]
  $region54: #{tpu_custom_call.1} parent=0
    _
  %s9 = ssub.s32 1, %s7
  %s10 = scalar_select 0, %s9, %s7
  $region1: #{tpu_custom_call.1} parent=0
    #allocation5 [shape = 'u8[8192]{0}', space=vmem, size = 0x2000, scoped, tag = 'input window, operand 0, single buffered']
    #allocation6 [shape = 's32[1]{0}', space=sflag, size = 0x4, scoped, tag = 'scoped memory for tpu_custom_call.1']
    #allocation7 [shape = 's32[1]{0}', space=sflag, size = 0x4, scoped, tag = 'scoped memory for tpu_custom_call.1']
    #allocation8 [shape = 'u8[32768]{0}', space=vmem, size = 0x8000, scoped, tag = 'input window, operand 1, single buffered']
    #allocation9 [shape = 's32[1]{0}', space=sflag, size = 0x4, scoped, tag = 'scoped memory for tpu_custom_call.1']
    #allocation10 [shape = 'u8[262144]{0}', space=vmem, size = 0x40000, scoped, tag = 'input window, operand 2, single buffered']
    #allocation11 [shape = 'u8[65536]{0}', space=vmem, size = 0x10000, scoped, tag = 'input window, operand 4, single buffered']
    #allocation12 [shape = 's32[1]{0}', space=sflag, size = 0x4, scoped, tag = 'scoped memory for tpu_custom_call.1']
    #allocation13 [shape = 'u8[8192]{0}', space=vmem, size = 0x2000, scoped, tag = 'output window, operand 0, single buffered']
    %11 = vsyncpa [#allocation6], 0
    %12 = vsyncpa [#allocation9], 0
    %13 = vsyncpa [#allocation12], 0
    %14 = vsyncpa [#allocation7], 0
    // Predicated region
    $region2: #{tpu_custom_call.1} parent=1 // pred_check
      _
    $region3: #{tpu_custom_call.1} parent=1 // pred_check_branch
      %16 = sbr.rel (0) target = $region5
    $region4: #{tpu_custom_call.1} parent=1 // pred_region
      %s18 = ssub.s32 256, 256
      %19 = vsyncadd [#allocation6], %s18
      %s20 = sshll.u32 [#allocation5], 4
      %s21 = int_to_ptr.vmem [resolvable:$true] %s20
      %26 = dma.hbm_to_vmem [thread:$0]  %s0, 256, %s21, [#allocation6], 128, 128, 8
    $region5: #{tpu_custom_call.1} parent=1 // pred_fallthru
      _
    // Predicated region
    $region6: #{tpu_custom_call.1} parent=1 // pred_check
      _
    $region7: #{tpu_custom_call.1} parent=1 // pred_check_branch
      %28 = sbr.rel (0) target = $region9
    $region8: #{tpu_custom_call.1} parent=1 // pred_region
      %s30 = ssub.s32 1024, 1024
      %31 = vsyncadd [#allocation9], %s30
      %s32 = sshll.u32 [#allocation8], 4
      %s33 = int_to_ptr.vmem [resolvable:$true] %s32
      %38 = dma.hbm_to_vmem [thread:$0]  %s1, 1024, %s33, [#allocation9], 512, 512, 32
    $region9: #{tpu_custom_call.1} parent=1 // pred_fallthru
      _
    // Predicated region
    $region10: #{tpu_custom_call.1} parent=1 // pred_check
      _
    $region11: #{tpu_custom_call.1} parent=1 // pred_check_branch
      %40 = sbr.rel (0) target = $region13
    $region12: #{tpu_custom_call.1} parent=1 // pred_region
      %s42 = ssub.s32 8192, 8192
      %43 = vsyncadd [#allocation9], %s42
      %s44 = sshll.u32 [#allocation10], 4
      %s45 = int_to_ptr.vmem [resolvable:$true] %s44
      %50 = dma.hbm_to_vmem [thread:$0]  %s2, 8192, %s45, [#allocation9], 512, 512, 32
    $region13: #{tpu_custom_call.1} parent=1 // pred_fallthru
      _
    // Predicated region
    $region14: #{tpu_custom_call.1} parent=1 // pred_check
      _
    $region15: #{tpu_custom_call.1} parent=1 // pred_check_branch
      %52 = sbr.rel (0) target = $region17
    $region16: #{tpu_custom_call.1} parent=1 // pred_region
      _
    $region17: #{tpu_custom_call.1} parent=1 // pred_fallthru
      _
    // Predicated region
    $region18: #{tpu_custom_call.1} parent=1 // pred_check
      _
    $region19: #{tpu_custom_call.1} parent=1 // pred_check_branch
      %54 = sbr.rel (0) target = $region21
    $region20: #{tpu_custom_call.1} parent=1 // pred_region
      %s56 = ssub.s32 2048, 2048
      %57 = vsyncadd [#allocation12], %s56
      %s58 = sshll.u32 [#allocation11], 4
      %s59 = int_to_ptr.vmem [resolvable:$true] %s58
      %64 = dma.hbm_to_vmem [thread:$0]  %s4, 2048, %s59, [#allocation12], 128, 128, 8
    $region21: #{tpu_custom_call.1} parent=1 // pred_fallthru
      _
    // Predicated region
    $region22: #{tpu_custom_call.1} parent=1 // pred_check
      _
    $region23: #{tpu_custom_call.1} parent=1 // pred_check_branch
      %66 = sbr.rel (0) target = $region25
    $region24: #{tpu_custom_call.1} parent=1 // pred_region
      _
    $region25: #{tpu_custom_call.1} parent=1 // pred_fallthru
      _
    // Predicated region
    $region26: #{tpu_custom_call.1} parent=1 // pred_check
      _
    $region27: #{tpu_custom_call.1} parent=1 // pred_check_branch
      %68 = sbr.rel (0) target = $region29
    $region28: #{tpu_custom_call.1} parent=1 // pred_region
      %69 = dma.done [#allocation6], 256
    $region29: #{tpu_custom_call.1} parent=1 // pred_fallthru
      _
    // Predicated region
    $region30: #{tpu_custom_call.1} parent=1 // pred_check
      _
    $region31: #{tpu_custom_call.1} parent=1 // pred_check_branch
      %71 = sbr.rel (0) target = $region33
    $region32: #{tpu_custom_call.1} parent=1 // pred_region
      %72 = dma.done [#allocation9], 1024
    $region33: #{tpu_custom_call.1} parent=1 // pred_fallthru
      _
    // Predicated region
    $region34: #{tpu_custom_call.1} parent=1 // pred_check
      _
    $region35: #{tpu_custom_call.1} parent=1 // pred_check_branch
      %74 = sbr.rel (0) target = $region37
    $region36: #{tpu_custom_call.1} parent=1 // pred_region
      %75 = dma.done [#allocation9], 8192
    $region37: #{tpu_custom_call.1} parent=1 // pred_fallthru
      _
    // Predicated region
    $region38: #{tpu_custom_call.1} parent=1 // pred_check
      _
    $region39: #{tpu_custom_call.1} parent=1 // pred_check_branch
      %77 = sbr.rel (0) target = $region41
    $region40: #{tpu_custom_call.1} parent=1 // pred_region
      %78 = dma.done [#allocation12], 2048
    $region41: #{tpu_custom_call.1} parent=1 // pred_fallthru
      _
    %p79 = scmp.eq.s32.totalorder 0, 0
    // Predicated region
    $region42: #{tpu_custom_call.1} parent=1 // pred_check
      %p80 = pneg %p79
    $region43: #{tpu_custom_call.1} parent=1 // pred_check_branch
      %82 = sbr.rel (%p80) target = $region45
    $region44: #{tpu_custom_call.1} parent=1 // pred_region
      %83 = vst [vmem:[#allocation2] sm:$0x3] 0.0
      %84 = vst [vmem:[#allocation3] sm:$0x3] 0.0
    $region45: #{tpu_custom_call.1} parent=1 // pred_fallthru
      _
    %v85 = vld [vmem:[#allocation5] sm:$0xff]
    %v86 = vld [vmem:[#allocation5 + $0x8] sm:$0xff]
    %v87 = vld [vmem:[#allocation8] sm:$0xff]
    %v88 = vld [vmem:[#allocation8 + $0x8] sm:$0xff]
    %v89 = vld [vmem:[#allocation8 + $0x10] sm:$0xff]
    %v90 = vld [vmem:[#allocation8 + $0x18] sm:$0xff]
    %v91 = vld [vmem:[#allocation8 + $0x20] sm:$0xff]
    %v92 = vld [vmem:[#allocation8 + $0x28] sm:$0xff]
    %v93 = vld [vmem:[#allocation8 + $0x30] sm:$0xff]
    %v94 = vld [vmem:[#allocation8 + $0x38] sm:$0xff]
    %v95 = vld [vmem:[%s3] sm:$0xf]
    %v97 = vlaneseq
    %v98 = vshrl.u32 %v97, 7
    %v99 = vsub.s32 0, %v98
    %v100 = vrot.slane %v95, %v99
    %v101 = vlaneseq
    %v102 = vshrl.u32 %v101, 7
    %v103 = vsub.s32 1, %v102
    %v104 = vrot.slane %v95, %v103
    %v105 = vlaneseq
    %v106 = vshrl.u32 %v105, 7
    %v107 = vsub.s32 2, %v106
    %v108 = vrot.slane %v95, %v107
    %v109 = vlaneseq
    %v110 = vshrl.u32 %v109, 7
    %v111 = vsub.s32 3, %v110
    %v112 = vrot.slane %v95, %v111
    %vm117 = vcmask 130048
    %v119 = vsel %vm117, %v85, 0
    %v122 = vsel %vm117, %v86, 0
    %124 = vmatprep.subr.mxu0 0.0
    %125 = vmatpush1.msra.mxu0 0.0
    %126 = vmatprep.subr.mxu0 0.0
    %127 = vmatpush1.msra.mxu0 0.0
    %128 = vmatprep.subr.mxu0 0.0
    %129 = vmatpush1.msra.mxu0 0.0
    %130 = vmatprep.subr.mxu0 0.0
    %131 = vmatpush1.msra.mxu0 0.0
    %132 = vmatprep.subr.mxu0 0.0
    %133 = vmatpush1.msra.mxu0 0.0
    %134 = vmatprep.subr.mxu0 0.0
    %135 = vmatpush1.msra.mxu0 0.0
    %136 = vmatprep.subr.mxu0 0.0
    %137 = vmatpush1.msra.mxu0 0.0
    %138 = vmatprep.subr.mxu0 0.0
    %139 = vmatpush1.msra.mxu0 0.0
    %140 = vmatprep.subr.mxu0 0.0
    %141 = vmatpush1.msra.mxu0 0.0
    %142 = vmatprep.subr.mxu0 0.0
    %143 = vmatpush1.msra.mxu0 0.0
    %144 = vmatprep.subr.mxu0 0.0
    %145 = vmatpush1.msra.mxu0 0.0
    %146 = vmatprep.subr.mxu0 0.0
    %147 = vmatpush1.msra.mxu0 0.0
    %148 = vmatprep.subr.mxu0 0.0
    %149 = vmatpush1.msra.mxu0 0.0
    %150 = vmatprep.subr.mxu0 0.0
    %151 = vmatpush1.msra.mxu0 0.0
    %152 = vmatprep.subr.mxu0 %v92
    %153 = vmatpush1.msra.mxu0 %v91
    %154 = vmatprep.subr.mxu0 %v88
    %155 = vmatpush1.msra.mxu0 %v87
    %156 = vmatprep.subr.mxu0 0.0
    %157 = vmatpush2.msra.mxu0 0.0
    %158 = vmatprep.subr.mxu0 0.0
    %159 = vmatpush2.msra.mxu0 0.0
    %160 = vmatprep.subr.mxu0 0.0
    %161 = vmatpush2.msra.mxu0 0.0
    %162 = vmatprep.subr.mxu0 0.0
    %163 = vmatpush2.msra.mxu0 0.0
    %164 = vmatprep.subr.mxu0 0.0
    %165 = vmatpush2.msra.mxu0 0.0
    %166 = vmatprep.subr.mxu0 0.0
    %167 = vmatpush2.msra.mxu0 0.0
    %168 = vmatprep.subr.mxu0 0.0
    %169 = vmatpush2.msra.mxu0 0.0
    %170 = vmatprep.subr.mxu0 0.0
    %171 = vmatpush2.msra.mxu0 0.0
    %172 = vmatprep.subr.mxu0 0.0
    %173 = vmatpush2.msra.mxu0 0.0
    %174 = vmatprep.subr.mxu0 0.0
    %175 = vmatpush2.msra.mxu0 0.0
    %176 = vmatprep.subr.mxu0 0.0
    %177 = vmatpush2.msra.mxu0 0.0
    %178 = vmatprep.subr.mxu0 0.0
    %179 = vmatpush2.msra.mxu0 0.0
    %180 = vmatprep.subr.mxu0 0.0
    %181 = vmatpush2.msra.mxu0 0.0
    %182 = vmatprep.subr.mxu0 0.0
    %183 = vmatpush2.msra.mxu0 0.0
    %184 = vmatprep.subr.mxu0 0.0
    %185 = vmatpush2.msra.mxu0 0.0
    %186 = vmatprep.subr.mxu0 0.0
    %187 = vmatpush2.msra.mxu0 0.0
    %188 = vmatprep.mubr.f32.mxu0 0.0
    %189 = vmatmul.mubr.f32.gmra.mxu0 %v119
    %v190 = vpop.f32.mrf.mxu0
    %v191 = vadd.f32 %v100, %v190
    %v192 = vpop.f32.mrf.mxu0
    %v193 = vadd.f32 %v104, %v192
    %194 = vmatprep.mubr.f32.mxu0 0.0
    %195 = vmatmul.mubr.f32.gmra.mxu0 %v122
    %v196 = vpop.f32.mrf.mxu0
    %v197 = vadd.f32 %v100, %v196
    %v198 = vpop.f32.mrf.mxu0
    %v199 = vadd.f32 %v104, %v198
    %200 = vdwg.mxu0
    %201 = vmatprep.subr.mxu0 0.0
    %202 = vmatpush1.msra.mxu0 0.0
    %203 = vmatprep.subr.mxu0 0.0
    %204 = vmatpush1.msra.mxu0 0.0
    %205 = vmatprep.subr.mxu0 0.0
    %206 = vmatpush1.msra.mxu0 0.0
    %207 = vmatprep.subr.mxu0 0.0
    %208 = vmatpush1.msra.mxu0 0.0
    %209 = vmatprep.subr.mxu0 0.0
    %210 = vmatpush1.msra.mxu0 0.0
    %211 = vmatprep.subr.mxu0 0.0
    %212 = vmatpush1.msra.mxu0 0.0
    %213 = vmatprep.subr.mxu0 0.0
    %214 = vmatpush1.msra.mxu0 0.0
    %215 = vmatprep.subr.mxu0 0.0
    %216 = vmatpush1.msra.mxu0 0.0
    %217 = vmatprep.subr.mxu0 0.0
    %218 = vmatpush1.msra.mxu0 0.0
    %219 = vmatprep.subr.mxu0 0.0
    %220 = vmatpush1.msra.mxu0 0.0
    %221 = vmatprep.subr.mxu0 0.0
    %222 = vmatpush1.msra.mxu0 0.0
    %223 = vmatprep.subr.mxu0 0.0
    %224 = vmatpush1.msra.mxu0 0.0
    %225 = vmatprep.subr.mxu0 0.0
    %226 = vmatpush1.msra.mxu0 0.0
    %227 = vmatprep.subr.mxu0 0.0
    %228 = vmatpush1.msra.mxu0 0.0
    %229 = vmatprep.subr.mxu0 %v94
    %230 = vmatpush1.msra.mxu0 %v93
    %231 = vmatprep.subr.mxu0 %v90
    %232 = vmatpush1.msra.mxu0 %v89
    %233 = vmatprep.subr.mxu0 0.0
    %234 = vmatpush2.msra.mxu0 0.0
    %235 = vmatprep.subr.mxu0 0.0
    %236 = vmatpush2.msra.mxu0 0.0
    %237 = vmatprep.subr.mxu0 0.0
    %238 = vmatpush2.msra.mxu0 0.0
    %239 = vmatprep.subr.mxu0 0.0
    %240 = vmatpush2.msra.mxu0 0.0
    %241 = vmatprep.subr.mxu0 0.0
    %242 = vmatpush2.msra.mxu0 0.0
    %243 = vmatprep.subr.mxu0 0.0
    %244 = vmatpush2.msra.mxu0 0.0
    %245 = vmatprep.subr.mxu0 0.0
    %246 = vmatpush2.msra.mxu0 0.0
    %247 = vmatprep.subr.mxu0 0.0
    %248 = vmatpush2.msra.mxu0 0.0
    %249 = vmatprep.subr.mxu0 0.0
    %250 = vmatpush2.msra.mxu0 0.0
    %251 = vmatprep.subr.mxu0 0.0
    %252 = vmatpush2.msra.mxu0 0.0
    %253 = vmatprep.subr.mxu0 0.0
    %254 = vmatpush2.msra.mxu0 0.0
    %255 = vmatprep.subr.mxu0 0.0
    %256 = vmatpush2.msra.mxu0 0.0
    %257 = vmatprep.subr.mxu0 0.0
    %258 = vmatpush2.msra.mxu0 0.0
    %259 = vmatprep.subr.mxu0 0.0
    %260 = vmatpush2.msra.mxu0 0.0
    %261 = vmatprep.subr.mxu0 0.0
    %262 = vmatpush2.msra.mxu0 0.0
    %263 = vmatprep.subr.mxu0 0.0
    %264 = vmatpush2.msra.mxu0 0.0
    %265 = vmatprep.mubr.f32.mxu0 0.0
    %266 = vmatmul.mubr.f32.gmra.mxu0 %v119
    %v267 = vpop.f32.mrf.mxu0
    %v268 = vadd.f32 %v108, %v267
    %v269 = vpop.f32.mrf.mxu0
    %v270 = vadd.f32 %v112, %v269
    %271 = vmatprep.mubr.f32.mxu0 0.0
    %272 = vmatmul.mubr.f32.gmra.mxu0 %v122
    %v273 = vpop.f32.mrf.mxu0
    %v274 = vadd.f32 %v108, %v273
    %v275 = vpop.f32.mrf.mxu0
    %v276 = vadd.f32 %v112, %v275
    %277 = vdwg.mxu0
    %v278 = vld [vmem:[#allocation2] sm:$0x3]
    %v279 = vld [vmem:[#allocation3] sm:$0x3]
    %v280 = vld [vmem:[#allocation10] sm:$0xff]
    %v281 = vld [vmem:[#allocation10 + $0x8] sm:$0xff]
    %v282 = vld [vmem:[#allocation10 + $0x10] sm:$0xff]
    %v283 = vld [vmem:[#allocation10 + $0x18] sm:$0xff]
    %v284 = vld [vmem:[#allocation10 + $0x20] sm:$0xff]
    %v285 = vld [vmem:[#allocation10 + $0x28] sm:$0xff]
    %v286 = vld [vmem:[#allocation10 + $0x30] sm:$0xff]
    %v287 = vld [vmem:[#allocation10 + $0x38] sm:$0xff]
    %v288 = vld [vmem:[#allocation10 + $0x40] sm:$0xff]
    %v289 = vld [vmem:[#allocation10 + $0x48] sm:$0xff]
    %v290 = vld [vmem:[#allocation10 + $0x50] sm:$0xff]
    %v291 = vld [vmem:[#allocation10 + $0x58] sm:$0xff]
    %v292 = vld [vmem:[#allocation10 + $0x60] sm:$0xff]
    %v293 = vld [vmem:[#allocation10 + $0x68] sm:$0xff]
    %v294 = vld [vmem:[#allocation10 + $0x70] sm:$0xff]
    %v295 = vld [vmem:[#allocation10 + $0x78] sm:$0xff]
    %v296 = vld [vmem:[#allocation10 + $0x80] sm:$0xff]
    %v297 = vld [vmem:[#allocation10 + $0x88] sm:$0xff]
    %v298 = vld [vmem:[#allocation10 + $0x90] sm:$0xff]
    %v299 = vld [vmem:[#allocation10 + $0x98] sm:$0xff]
    %v300 = vld [vmem:[#allocation10 + $0xa0] sm:$0xff]
    %v301 = vld [vmem:[#allocation10 + $0xa8] sm:$0xff]
    %v302 = vld [vmem:[#allocation10 + $0xb0] sm:$0xff]
    %v303 = vld [vmem:[#allocation10 + $0xb8] sm:$0xff]
    %v304 = vld [vmem:[#allocation10 + $0xc0] sm:$0xff]
    %v305 = vld [vmem:[#allocation10 + $0xc8] sm:$0xff]
    %v306 = vld [vmem:[#allocation10 + $0xd0] sm:$0xff]
    %v307 = vld [vmem:[#allocation10 + $0xd8] sm:$0xff]
    %v308 = vld [vmem:[#allocation10 + $0xe0] sm:$0xff]
    %v309 = vld [vmem:[#allocation10 + $0xe8] sm:$0xff]
    %v310 = vld [vmem:[#allocation10 + $0xf0] sm:$0xff]
    %v311 = vld [vmem:[#allocation10 + $0xf8] sm:$0xff]
    %v312 = vld [vmem:[#allocation10 + $0x100] sm:$0xff]
    %v313 = vld [vmem:[#allocation10 + $0x108] sm:$0xff]
    %v314 = vld [vmem:[#allocation10 + $0x110] sm:$0xff]
    %v315 = vld [vmem:[#allocation10 + $0x118] sm:$0xff]
    %v316 = vld [vmem:[#allocation10 + $0x120] sm:$0xff]
    %v317 = vld [vmem:[#allocation10 + $0x128] sm:$0xff]
    %v318 = vld [vmem:[#allocation10 + $0x130] sm:$0xff]
    %v319 = vld [vmem:[#allocation10 + $0x138] sm:$0xff]
    %v320 = vld [vmem:[#allocation10 + $0x140] sm:$0xff]
    %v321 = vld [vmem:[#allocation10 + $0x148] sm:$0xff]
    %v322 = vld [vmem:[#allocation10 + $0x150] sm:$0xff]
    %v323 = vld [vmem:[#allocation10 + $0x158] sm:$0xff]
    %v324 = vld [vmem:[#allocation10 + $0x160] sm:$0xff]
    %v325 = vld [vmem:[#allocation10 + $0x168] sm:$0xff]
    %v326 = vld [vmem:[#allocation10 + $0x170] sm:$0xff]
    %v327 = vld [vmem:[#allocation10 + $0x178] sm:$0xff]
    %v328 = vld [vmem:[#allocation10 + $0x180] sm:$0xff]
    %v329 = vld [vmem:[#allocation10 + $0x188] sm:$0xff]
    %v330 = vld [vmem:[#allocation10 + $0x190] sm:$0xff]
    %v331 = vld [vmem:[#allocation10 + $0x198] sm:$0xff]
    %v332 = vld [vmem:[#allocation10 + $0x1a0] sm:$0xff]
    %v333 = vld [vmem:[#allocation10 + $0x1a8] sm:$0xff]
    %v334 = vld [vmem:[#allocation10 + $0x1b0] sm:$0xff]
    %v335 = vld [vmem:[#allocation10 + $0x1b8] sm:$0xff]
    %v336 = vld [vmem:[#allocation10 + $0x1c0] sm:$0xff]
    %v337 = vld [vmem:[#allocation10 + $0x1c8] sm:$0xff]
    %v338 = vld [vmem:[#allocation10 + $0x1d0] sm:$0xff]
    %v339 = vld [vmem:[#allocation10 + $0x1d8] sm:$0xff]
    %v340 = vld [vmem:[#allocation10 + $0x1e0] sm:$0xff]
    %v341 = vld [vmem:[#allocation10 + $0x1e8] sm:$0xff]
    %v342 = vld [vmem:[#allocation10 + $0x1f0] sm:$0xff]
    %v343 = vld [vmem:[#allocation10 + $0x1f8] sm:$0xff]
    %344 = vmatprep.subr.mxu0 %v341
    %345 = vmatpush1.msra.mxu0 %v340
    %346 = vmatprep.subr.mxu0 %v337
    %347 = vmatpush1.msra.mxu0 %v336
    %348 = vmatprep.subr.mxu0 %v333
    %349 = vmatpush1.msra.mxu0 %v332
    %350 = vmatprep.subr.mxu0 %v329
    %351 = vmatpush1.msra.mxu0 %v328
    %352 = vmatprep.subr.mxu0 %v325
    %353 = vmatpush1.msra.mxu0 %v324
    %354 = vmatprep.subr.mxu0 %v321
    %355 = vmatpush1.msra.mxu0 %v320
    %356 = vmatprep.subr.mxu0 %v317
    %357 = vmatpush1.msra.mxu0 %v316
    %358 = vmatprep.subr.mxu0 %v313
    %359 = vmatpush1.msra.mxu0 %v312
    %360 = vmatprep.subr.mxu0 %v309
    %361 = vmatpush1.msra.mxu0 %v308
    %362 = vmatprep.subr.mxu0 %v305
    %363 = vmatpush1.msra.mxu0 %v304
    %364 = vmatprep.subr.mxu0 %v301
    %365 = vmatpush1.msra.mxu0 %v300
    %366 = vmatprep.subr.mxu0 %v297
    %367 = vmatpush1.msra.mxu0 %v296
    %368 = vmatprep.subr.mxu0 %v293
    %369 = vmatpush1.msra.mxu0 %v292
    %370 = vmatprep.subr.mxu0 %v289
    %371 = vmatpush1.msra.mxu0 %v288
    %372 = vmatprep.subr.mxu0 %v285
    %373 = vmatpush1.msra.mxu0 %v284
    %374 = vmatprep.subr.mxu0 %v281
    %375 = vmatpush1.msra.mxu0 %v280
    %376 = vmatprep.subr.mxu0 0.0
    %377 = vmatpush2.msra.mxu0 0.0
    %378 = vmatprep.subr.mxu0 0.0
    %379 = vmatpush2.msra.mxu0 0.0
    %380 = vmatprep.subr.mxu0 0.0
    %381 = vmatpush2.msra.mxu0 0.0
    %382 = vmatprep.subr.mxu0 0.0
    %383 = vmatpush2.msra.mxu0 0.0
    %384 = vmatprep.subr.mxu0 0.0
    %385 = vmatpush2.msra.mxu0 0.0
    %386 = vmatprep.subr.mxu0 0.0
    %387 = vmatpush2.msra.mxu0 0.0
    %388 = vmatprep.subr.mxu0 0.0
    %389 = vmatpush2.msra.mxu0 0.0
    %390 = vmatprep.subr.mxu0 0.0
    %391 = vmatpush2.msra.mxu0 0.0
    %392 = vmatprep.subr.mxu0 0.0
    %393 = vmatpush2.msra.mxu0 0.0
    %394 = vmatprep.subr.mxu0 0.0
    %395 = vmatpush2.msra.mxu0 0.0
    %396 = vmatprep.subr.mxu0 0.0
    %397 = vmatpush2.msra.mxu0 0.0
    %398 = vmatprep.subr.mxu0 0.0
    %399 = vmatpush2.msra.mxu0 0.0
    %400 = vmatprep.subr.mxu0 0.0
    %401 = vmatpush2.msra.mxu0 0.0
    %402 = vmatprep.subr.mxu0 0.0
    %403 = vmatpush2.msra.mxu0 0.0
    %404 = vmatprep.subr.mxu0 0.0
    %405 = vmatpush2.msra.mxu0 0.0
    %406 = vmatprep.subr.mxu0 0.0
    %407 = vmatpush2.msra.mxu0 0.0
    %408 = vmatprep.mubr.f32.mxu0 0.0
    %409 = vmatmul.mubr.f32.gmra.mxu0 %v278
    %v410 = vpop.f32.mrf.mxu0
    %v411 = vadd.f32 0.0, %v410
    %v412 = vpop.f32.mrf.mxu0
    %v413 = vadd.f32 0.0, %v412
    %414 = vdwg.mxu0
    %415 = vmatprep.subr.mxu0 %v343
    %416 = vmatpush1.msra.mxu0 %v342
    %417 = vmatprep.subr.mxu0 %v339
    %418 = vmatpush1.msra.mxu0 %v338
    %419 = vmatprep.subr.mxu0 %v335
    %420 = vmatpush1.msra.mxu0 %v334
    %421 = vmatprep.subr.mxu0 %v331
    %422 = vmatpush1.msra.mxu0 %v330
    %423 = vmatprep.subr.mxu0 %v327
    %424 = vmatpush1.msra.mxu0 %v326
    %425 = vmatprep.subr.mxu0 %v323
    %426 = vmatpush1.msra.mxu0 %v322
    %427 = vmatprep.subr.mxu0 %v319
    %428 = vmatpush1.msra.mxu0 %v318
    %429 = vmatprep.subr.mxu0 %v315
    %430 = vmatpush1.msra.mxu0 %v314
    %431 = vmatprep.subr.mxu0 %v311
    %432 = vmatpush1.msra.mxu0 %v310
    %433 = vmatprep.subr.mxu0 %v307
    %434 = vmatpush1.msra.mxu0 %v306
    %435 = vmatprep.subr.mxu0 %v303
    %436 = vmatpush1.msra.mxu0 %v302
    %437 = vmatprep.subr.mxu0 %v299
    %438 = vmatpush1.msra.mxu0 %v298
    %439 = vmatprep.subr.mxu0 %v295
    %440 = vmatpush1.msra.mxu0 %v294
    %441 = vmatprep.subr.mxu0 %v291
    %442 = vmatpush1.msra.mxu0 %v290
    %443 = vmatprep.subr.mxu0 %v287
    %444 = vmatpush1.msra.mxu0 %v286
    %445 = vmatprep.subr.mxu0 %v283
    %446 = vmatpush1.msra.mxu0 %v282
    %447 = vmatprep.subr.mxu0 0.0
    %448 = vmatpush2.msra.mxu0 0.0
    %449 = vmatprep.subr.mxu0 0.0
    %450 = vmatpush2.msra.mxu0 0.0
    %451 = vmatprep.subr.mxu0 0.0
    %452 = vmatpush2.msra.mxu0 0.0
    %453 = vmatprep.subr.mxu0 0.0
    %454 = vmatpush2.msra.mxu0 0.0
    %455 = vmatprep.subr.mxu0 0.0
    %456 = vmatpush2.msra.mxu0 0.0
    %457 = vmatprep.subr.mxu0 0.0
    %458 = vmatpush2.msra.mxu0 0.0
    %459 = vmatprep.subr.mxu0 0.0
    %460 = vmatpush2.msra.mxu0 0.0
    %461 = vmatprep.subr.mxu0 0.0
    %462 = vmatpush2.msra.mxu0 0.0
    %463 = vmatprep.subr.mxu0 0.0
    %464 = vmatpush2.msra.mxu0 0.0
    %465 = vmatprep.subr.mxu0 0.0
    %466 = vmatpush2.msra.mxu0 0.0
    %467 = vmatprep.subr.mxu0 0.0
    %468 = vmatpush2.msra.mxu0 0.0
    %469 = vmatprep.subr.mxu0 0.0
    %470 = vmatpush2.msra.mxu0 0.0
    %471 = vmatprep.subr.mxu0 0.0
    %472 = vmatpush2.msra.mxu0 0.0
    %473 = vmatprep.subr.mxu0 0.0
    %474 = vmatpush2.msra.mxu0 0.0
    %475 = vmatprep.subr.mxu0 0.0
    %476 = vmatpush2.msra.mxu0 0.0
    %477 = vmatprep.subr.mxu0 0.0
    %478 = vmatpush2.msra.mxu0 0.0
    %479 = vmatprep.mubr.f32.mxu0 0.0
    %480 = vmatmul.mubr.f32.gmra.mxu0 %v278
    %v481 = vpop.f32.mrf.mxu0
    %v482 = vadd.f32 0.0, %v481
    %v483 = vpop.f32.mrf.mxu0
    %v484 = vadd.f32 0.0, %v483
    %485 = vdwg.mxu0
    %v486 = vadd.f32 %v191, %v411
    %v487 = vadd.f32 %v193, %v413
    %v488 = vadd.f32 %v268, %v482
    %v489 = vadd.f32 %v270, %v484
    %v490 = vxor.u32 %v486, 2147483648
    %v491 = vmul.f32 %v490, 1.442695
    %v492 = vpow.pop %v491
    %v493 = vadd.f32 %v492, 1.0
    %v494 = vrcp.pop %v493
    %v495 = vmul.f32 1.0, %v494
    %v496 = vxor.u32 %v487, 2147483648
    %v497 = vmul.f32 %v496, 1.442695
    %v498 = vpow.pop %v497
    %v499 = vadd.f32 %v498, 1.0
    %v500 = vrcp.pop %v499
    %v501 = vmul.f32 1.0, %v500
    %v502 = vtanh.pop %v488
    %v503 = vxor.u32 %v489, 2147483648
    %v504 = vmul.f32 %v503, 1.442695
    %v505 = vpow.pop %v504
    %v506 = vadd.f32 %v505, 1.0
    %v507 = vrcp.pop %v506
    %v508 = vmul.f32 1.0, %v507
    %v509 = vmul.f32 %v501, %v279
    %v510 = vmul.f32 %v495, %v502
    %v511 = vadd.f32 %v509, %v510
    %v512 = vtanh.pop %v511
    %v513 = vmul.f32 %v508, %v512
    %514 = vst [vmem:[#allocation4] sm:$0x3] %v513
    %v515 = vld [vmem:[#allocation10] sm:$0xff]
    %v516 = vld [vmem:[#allocation10 + $0x8] sm:$0xff]
    %v517 = vld [vmem:[#allocation10 + $0x10] sm:$0xff]
    %v518 = vld [vmem:[#allocation10 + $0x18] sm:$0xff]
    %v519 = vld [vmem:[#allocation10 + $0x20] sm:$0xff]
    %v520 = vld [vmem:[#allocation10 + $0x28] sm:$0xff]
    %v521 = vld [vmem:[#allocation10 + $0x30] sm:$0xff]
    %v522 = vld [vmem:[#allocation10 + $0x38] sm:$0xff]
    %v523 = vld [vmem:[#allocation10 + $0x40] sm:$0xff]
    %v524 = vld [vmem:[#allocation10 + $0x48] sm:$0xff]
    %v525 = vld [vmem:[#allocation10 + $0x50] sm:$0xff]
    %v526 = vld [vmem:[#allocation10 + $0x58] sm:$0xff]
    %v527 = vld [vmem:[#allocation10 + $0x60] sm:$0xff]
    %v528 = vld [vmem:[#allocation10 + $0x68] sm:$0xff]
    %v529 = vld [vmem:[#allocation10 + $0x70] sm:$0xff]
    %v530 = vld [vmem:[#allocation10 + $0x78] sm:$0xff]
    %v531 = vld [vmem:[#allocation10 + $0x80] sm:$0xff]
    %v532 = vld [vmem:[#allocation10 + $0x88] sm:$0xff]
    %v533 = vld [vmem:[#allocation10 + $0x90] sm:$0xff]
    %v534 = vld [vmem:[#allocation10 + $0x98] sm:$0xff]
    %v535 = vld [vmem:[#allocation10 + $0xa0] sm:$0xff]
    %v536 = vld [vmem:[#allocation10 + $0xa8] sm:$0xff]
    %v537 = vld [vmem:[#allocation10 + $0xb0] sm:$0xff]
    %v538 = vld [vmem:[#allocation10 + $0xb8] sm:$0xff]
    %v539 = vld [vmem:[#allocation10 + $0xc0] sm:$0xff]
    %v540 = vld [vmem:[#allocation10 + $0xc8] sm:$0xff]
    %v541 = vld [vmem:[#allocation10 + $0xd0] sm:$0xff]
    %v542 = vld [vmem:[#allocation10 + $0xd8] sm:$0xff]
    %v543 = vld [vmem:[#allocation10 + $0xe0] sm:$0xff]
    %v544 = vld [vmem:[#allocation10 + $0xe8] sm:$0xff]
    %v545 = vld [vmem:[#allocation10 + $0xf0] sm:$0xff]
    %v546 = vld [vmem:[#allocation10 + $0xf8] sm:$0xff]
    %v547 = vld [vmem:[#allocation10 + $0x100] sm:$0xff]
    %v548 = vld [vmem:[#allocation10 + $0x108] sm:$0xff]
    %v549 = vld [vmem:[#allocation10 + $0x110] sm:$0xff]
    %v550 = vld [vmem:[#allocation10 + $0x118] sm:$0xff]
    %v551 = vld [vmem:[#allocation10 + $0x120] sm:$0xff]
    %v552 = vld [vmem:[#allocation10 + $0x128] sm:$0xff]
    %v553 = vld [vmem:[#allocation10 + $0x130] sm:$0xff]
    %v554 = vld [vmem:[#allocation10 + $0x138] sm:$0xff]
    %v555 = vld [vmem:[#allocation10 + $0x140] sm:$0xff]
    %v556 = vld [vmem:[#allocation10 + $0x148] sm:$0xff]
    %v557 = vld [vmem:[#allocation10 + $0x150] sm:$0xff]
    %v558 = vld [vmem:[#allocation10 + $0x158] sm:$0xff]
    %v559 = vld [vmem:[#allocation10 + $0x160] sm:$0xff]
    %v560 = vld [vmem:[#allocation10 + $0x168] sm:$0xff]
    %v561 = vld [vmem:[#allocation10 + $0x170] sm:$0xff]
    %v562 = vld [vmem:[#allocation10 + $0x178] sm:$0xff]
    %v563 = vld [vmem:[#allocation10 + $0x180] sm:$0xff]
    %v564 = vld [vmem:[#allocation10 + $0x188] sm:$0xff]
    %v565 = vld [vmem:[#allocation10 + $0x190] sm:$0xff]
    %v566 = vld [vmem:[#allocation10 + $0x198] sm:$0xff]
    %v567 = vld [vmem:[#allocation10 + $0x1a0] sm:$0xff]
    %v568 = vld [vmem:[#allocation10 + $0x1a8] sm:$0xff]
    %v569 = vld [vmem:[#allocation10 + $0x1b0] sm:$0xff]
    %v570 = vld [vmem:[#allocation10 + $0x1b8] sm:$0xff]
    %v571 = vld [vmem:[#allocation10 + $0x1c0] sm:$0xff]
    %v572 = vld [vmem:[#allocation10 + $0x1c8] sm:$0xff]
    %v573 = vld [vmem:[#allocation10 + $0x1d0] sm:$0xff]
    %v574 = vld [vmem:[#allocation10 + $0x1d8] sm:$0xff]
    %v575 = vld [vmem:[#allocation10 + $0x1e0] sm:$0xff]
    %v576 = vld [vmem:[#allocation10 + $0x1e8] sm:$0xff]
    %v577 = vld [vmem:[#allocation10 + $0x1f0] sm:$0xff]
    %v578 = vld [vmem:[#allocation10 + $0x1f8] sm:$0xff]
    %579 = vmatprep.subr.mxu0 %v576
    %580 = vmatpush1.msra.mxu0 %v575
    %581 = vmatprep.subr.mxu0 %v572
    %582 = vmatpush1.msra.mxu0 %v571
    %583 = vmatprep.subr.mxu0 %v568
    %584 = vmatpush1.msra.mxu0 %v567
    %585 = vmatprep.subr.mxu0 %v564
    %586 = vmatpush1.msra.mxu0 %v563
    %587 = vmatprep.subr.mxu0 %v560
    %588 = vmatpush1.msra.mxu0 %v559
    %589 = vmatprep.subr.mxu0 %v556
    %590 = vmatpush1.msra.mxu0 %v555
    %591 = vmatprep.subr.mxu0 %v552
    %592 = vmatpush1.msra.mxu0 %v551
    %593 = vmatprep.subr.mxu0 %v548
    %594 = vmatpush1.msra.mxu0 %v547
    %595 = vmatprep.subr.mxu0 %v544
    %596 = vmatpush1.msra.mxu0 %v543
    %597 = vmatprep.subr.mxu0 %v540
    %598 = vmatpush1.msra.mxu0 %v539
    %599 = vmatprep.subr.mxu0 %v536
    %600 = vmatpush1.msra.mxu0 %v535
    %601 = vmatprep.subr.mxu0 %v532
    %602 = vmatpush1.msra.mxu0 %v531
    %603 = vmatprep.subr.mxu0 %v528
    %604 = vmatpush1.msra.mxu0 %v527
    %605 = vmatprep.subr.mxu0 %v524
    %606 = vmatpush1.msra.mxu0 %v523
    %607 = vmatprep.subr.mxu0 %v520
    %608 = vmatpush1.msra.mxu0 %v519
    %609 = vmatprep.subr.mxu0 %v516
    %610 = vmatpush1.msra.mxu0 %v515
    %611 = vmatprep.subr.mxu0 0.0
    %612 = vmatpush2.msra.mxu0 0.0
    %613 = vmatprep.subr.mxu0 0.0
    %614 = vmatpush2.msra.mxu0 0.0
    %615 = vmatprep.subr.mxu0 0.0
    %616 = vmatpush2.msra.mxu0 0.0
    %617 = vmatprep.subr.mxu0 0.0
    %618 = vmatpush2.msra.mxu0 0.0
    %619 = vmatprep.subr.mxu0 0.0
    %620 = vmatpush2.msra.mxu0 0.0
    %621 = vmatprep.subr.mxu0 0.0
    %622 = vmatpush2.msra.mxu0 0.0
    %623 = vmatprep.subr.mxu0 0.0
    %624 = vmatpush2.msra.mxu0 0.0
    %625 = vmatprep.subr.mxu0 0.0
    %626 = vmatpush2.msra.mxu0 0.0
    %627 = vmatprep.subr.mxu0 0.0
    %628 = vmatpush2.msra.mxu0 0.0
    %629 = vmatprep.subr.mxu0 0.0
    %630 = vmatpush2.msra.mxu0 0.0
    %631 = vmatprep.subr.mxu0 0.0
    %632 = vmatpush2.msra.mxu0 0.0
    %633 = vmatprep.subr.mxu0 0.0
    %634 = vmatpush2.msra.mxu0 0.0
    %635 = vmatprep.subr.mxu0 0.0
    %636 = vmatpush2.msra.mxu0 0.0
    %637 = vmatprep.subr.mxu0 0.0
    %638 = vmatpush2.msra.mxu0 0.0
    %639 = vmatprep.subr.mxu0 0.0
    %640 = vmatpush2.msra.mxu0 0.0
    %641 = vmatprep.subr.mxu0 0.0
    %642 = vmatpush2.msra.mxu0 0.0
    %643 = vmatprep.mubr.f32.mxu0 0.0
    %644 = vmatmul.mubr.f32.gmra.mxu0 %v513
    %v645 = vpop.f32.mrf.mxu0
    %v646 = vadd.f32 0.0, %v645
    %v647 = vpop.f32.mrf.mxu0
    %v648 = vadd.f32 0.0, %v647
    %649 = vdwg.mxu0
    %650 = vmatprep.subr.mxu0 %v578
    %651 = vmatpush1.msra.mxu0 %v577
    %652 = vmatprep.subr.mxu0 %v574
    %653 = vmatpush1.msra.mxu0 %v573
    %654 = vmatprep.subr.mxu0 %v570
    %655 = vmatpush1.msra.mxu0 %v569
    %656 = vmatprep.subr.mxu0 %v566
    %657 = vmatpush1.msra.mxu0 %v565
    %658 = vmatprep.subr.mxu0 %v562
    %659 = vmatpush1.msra.mxu0 %v561
    %660 = vmatprep.subr.mxu0 %v558
    %661 = vmatpush1.msra.mxu0 %v557
    %662 = vmatprep.subr.mxu0 %v554
    %663 = vmatpush1.msra.mxu0 %v553
    %664 = vmatprep.subr.mxu0 %v550
    %665 = vmatpush1.msra.mxu0 %v549
    %666 = vmatprep.subr.mxu0 %v546
    %667 = vmatpush1.msra.mxu0 %v545
    %668 = vmatprep.subr.mxu0 %v542
    %669 = vmatpush1.msra.mxu0 %v541
    %670 = vmatprep.subr.mxu0 %v538
    %671 = vmatpush1.msra.mxu0 %v537
    %672 = vmatprep.subr.mxu0 %v534
    %673 = vmatpush1.msra.mxu0 %v533
    %674 = vmatprep.subr.mxu0 %v530
    %675 = vmatpush1.msra.mxu0 %v529
    %676 = vmatprep.subr.mxu0 %v526
    %677 = vmatpush1.msra.mxu0 %v525
    %678 = vmatprep.subr.mxu0 %v522
    %679 = vmatpush1.msra.mxu0 %v521
    %680 = vmatprep.subr.mxu0 %v518
    %681 = vmatpush1.msra.mxu0 %v517
    %682 = vmatprep.subr.mxu0 0.0
    %683 = vmatpush2.msra.mxu0 0.0
    %684 = vmatprep.subr.mxu0 0.0
    %685 = vmatpush2.msra.mxu0 0.0
    %686 = vmatprep.subr.mxu0 0.0
    %687 = vmatpush2.msra.mxu0 0.0
    %688 = vmatprep.subr.mxu0 0.0
    %689 = vmatpush2.msra.mxu0 0.0
    %690 = vmatprep.subr.mxu0 0.0
    %691 = vmatpush2.msra.mxu0 0.0
    %692 = vmatprep.subr.mxu0 0.0
    %693 = vmatpush2.msra.mxu0 0.0
    %694 = vmatprep.subr.mxu0 0.0
    %695 = vmatpush2.msra.mxu0 0.0
    %696 = vmatprep.subr.mxu0 0.0
    %697 = vmatpush2.msra.mxu0 0.0
    %698 = vmatprep.subr.mxu0 0.0
    %699 = vmatpush2.msra.mxu0 0.0
    %700 = vmatprep.subr.mxu0 0.0
    %701 = vmatpush2.msra.mxu0 0.0
    %702 = vmatprep.subr.mxu0 0.0
    %703 = vmatpush2.msra.mxu0 0.0
    %704 = vmatprep.subr.mxu0 0.0
    %705 = vmatpush2.msra.mxu0 0.0
    %706 = vmatprep.subr.mxu0 0.0
    %707 = vmatpush2.msra.mxu0 0.0
    %708 = vmatprep.subr.mxu0 0.0
    %709 = vmatpush2.msra.mxu0 0.0
    %710 = vmatprep.subr.mxu0 0.0
    %711 = vmatpush2.msra.mxu0 0.0
    %712 = vmatprep.subr.mxu0 0.0
    %713 = vmatpush2.msra.mxu0 0.0
    %714 = vmatprep.mubr.f32.mxu0 0.0
    %715 = vmatmul.mubr.f32.gmra.mxu0 %v513
    %v716 = vpop.f32.mrf.mxu0
    %v717 = vadd.f32 0.0, %v716
    %v718 = vpop.f32.mrf.mxu0
    %v719 = vadd.f32 0.0, %v718
    %720 = vdwg.mxu0
    %v725 = vrot.slane %v646, 6
    %v726 = vrot.slane %v648, 6
    %v727 = vrot.slane %v717, 6
    %v728 = vrot.slane %v719, 6
    %v733 = vadd.f32 %v191, %v725
    %v734 = vadd.f32 %v193, %v726
    %v735 = vadd.f32 %v268, %v727
    %v736 = vadd.f32 %v270, %v728
    %v737 = vxor.u32 %v733, 2147483648
    %v738 = vmul.f32 %v737, 1.442695
    %v739 = vpow.pop %v738
    %v740 = vadd.f32 %v739, 1.0
    %v741 = vrcp.pop %v740
    %v742 = vmul.f32 1.0, %v741
    %v743 = vxor.u32 %v734, 2147483648
    %v744 = vmul.f32 %v743, 1.442695
    %v745 = vpow.pop %v744
    %v746 = vadd.f32 %v745, 1.0
    %v747 = vrcp.pop %v746
    %v748 = vmul.f32 1.0, %v747
    %v749 = vtanh.pop %v735
    %v750 = vxor.u32 %v736, 2147483648
    %v751 = vmul.f32 %v750, 1.442695
    %v752 = vpow.pop %v751
    %v753 = vadd.f32 %v752, 1.0
    %v754 = vrcp.pop %v753
    %v755 = vmul.f32 1.0, %v754
    %v757 = vrot.slane %v511, 6
    %v759 = vmul.f32 %v748, %v757
    %v760 = vmul.f32 %v742, %v749
    %v761 = vadd.f32 %v759, %v760
    %v762 = vtanh.pop %v761
    %v763 = vmul.f32 %v755, %v762
    %764 = vst [vmem:[#allocation4] sm:$0xc] %v763
    %v765 = vld [vmem:[#allocation10] sm:$0xff]
    %v766 = vld [vmem:[#allocation10 + $0x8] sm:$0xff]
    %v767 = vld [vmem:[#allocation10 + $0x10] sm:$0xff]
    %v768 = vld [vmem:[#allocation10 + $0x18] sm:$0xff]
    %v769 = vld [vmem:[#allocation10 + $0x20] sm:$0xff]
    %v770 = vld [vmem:[#allocation10 + $0x28] sm:$0xff]
    %v771 = vld [vmem:[#allocation10 + $0x30] sm:$0xff]
    %v772 = vld [vmem:[#allocation10 + $0x38] sm:$0xff]
    %v773 = vld [vmem:[#allocation10 + $0x40] sm:$0xff]
    %v774 = vld [vmem:[#allocation10 + $0x48] sm:$0xff]
    %v775 = vld [vmem:[#allocation10 + $0x50] sm:$0xff]
    %v776 = vld [vmem:[#allocation10 + $0x58] sm:$0xff]
    %v777 = vld [vmem:[#allocation10 + $0x60] sm:$0xff]
    %v778 = vld [vmem:[#allocation10 + $0x68] sm:$0xff]
    %v779 = vld [vmem:[#allocation10 + $0x70] sm:$0xff]
    %v780 = vld [vmem:[#allocation10 + $0x78] sm:$0xff]
    %v781 = vld [vmem:[#allocation10 + $0x80] sm:$0xff]
    %v782 = vld [vmem:[#allocation10 + $0x88] sm:$0xff]
    %v783 = vld [vmem:[#allocation10 + $0x90] sm:$0xff]
    %v784 = vld [vmem:[#allocation10 + $0x98] sm:$0xff]
    %v785 = vld [vmem:[#allocation10 + $0xa0] sm:$0xff]
    %v786 = vld [vmem:[#allocation10 + $0xa8] sm:$0xff]
    %v787 = vld [vmem:[#allocation10 + $0xb0] sm:$0xff]
    %v788 = vld [vmem:[#allocation10 + $0xb8] sm:$0xff]
    %v789 = vld [vmem:[#allocation10 + $0xc0] sm:$0xff]
    %v790 = vld [vmem:[#allocation10 + $0xc8] sm:$0xff]
    %v791 = vld [vmem:[#allocation10 + $0xd0] sm:$0xff]
    %v792 = vld [vmem:[#allocation10 + $0xd8] sm:$0xff]
    %v793 = vld [vmem:[#allocation10 + $0xe0] sm:$0xff]
    %v794 = vld [vmem:[#allocation10 + $0xe8] sm:$0xff]
    %v795 = vld [vmem:[#allocation10 + $0xf0] sm:$0xff]
    %v796 = vld [vmem:[#allocation10 + $0xf8] sm:$0xff]
    %v797 = vld [vmem:[#allocation10 + $0x100] sm:$0xff]
    %v798 = vld [vmem:[#allocation10 + $0x108] sm:$0xff]
    %v799 = vld [vmem:[#allocation10 + $0x110] sm:$0xff]
    %v800 = vld [vmem:[#allocation10 + $0x118] sm:$0xff]
    %v801 = vld [vmem:[#allocation10 + $0x120] sm:$0xff]
    %v802 = vld [vmem:[#allocation10 + $0x128] sm:$0xff]
    %v803 = vld [vmem:[#allocation10 + $0x130] sm:$0xff]
    %v804 = vld [vmem:[#allocation10 + $0x138] sm:$0xff]
    %v805 = vld [vmem:[#allocation10 + $0x140] sm:$0xff]
    %v806 = vld [vmem:[#allocation10 + $0x148] sm:$0xff]
    %v807 = vld [vmem:[#allocation10 + $0x150] sm:$0xff]
    %v808 = vld [vmem:[#allocation10 + $0x158] sm:$0xff]
    %v809 = vld [vmem:[#allocation10 + $0x160] sm:$0xff]
    %v810 = vld [vmem:[#allocation10 + $0x168] sm:$0xff]
    %v811 = vld [vmem:[#allocation10 + $0x170] sm:$0xff]
    %v812 = vld [vmem:[#allocation10 + $0x178] sm:$0xff]
    %v813 = vld [vmem:[#allocation10 + $0x180] sm:$0xff]
    %v814 = vld [vmem:[#allocation10 + $0x188] sm:$0xff]
    %v815 = vld [vmem:[#allocation10 + $0x190] sm:$0xff]
    %v816 = vld [vmem:[#allocation10 + $0x198] sm:$0xff]
    %v817 = vld [vmem:[#allocation10 + $0x1a0] sm:$0xff]
    %v818 = vld [vmem:[#allocation10 + $0x1a8] sm:$0xff]
    %v819 = vld [vmem:[#allocation10 + $0x1b0] sm:$0xff]
    %v820 = vld [vmem:[#allocation10 + $0x1b8] sm:$0xff]
    %v821 = vld [vmem:[#allocation10 + $0x1c0] sm:$0xff]
    %v822 = vld [vmem:[#allocation10 + $0x1c8] sm:$0xff]
    %v823 = vld [vmem:[#allocation10 + $0x1d0] sm:$0xff]
    %v824 = vld [vmem:[#allocation10 + $0x1d8] sm:$0xff]
    %v825 = vld [vmem:[#allocation10 + $0x1e0] sm:$0xff]
    %v826 = vld [vmem:[#allocation10 + $0x1e8] sm:$0xff]
    %v827 = vld [vmem:[#allocation10 + $0x1f0] sm:$0xff]
    %v828 = vld [vmem:[#allocation10 + $0x1f8] sm:$0xff]
    %v830 = vrot.slane %v763, 2
    %832 = vmatprep.subr.mxu0 %v826
    %833 = vmatpush1.msra.mxu0 %v825
    %834 = vmatprep.subr.mxu0 %v822
    %835 = vmatpush1.msra.mxu0 %v821
    %836 = vmatprep.subr.mxu0 %v818
    %837 = vmatpush1.msra.mxu0 %v817
    %838 = vmatprep.subr.mxu0 %v814
    %839 = vmatpush1.msra.mxu0 %v813
    %840 = vmatprep.subr.mxu0 %v810
    %841 = vmatpush1.msra.mxu0 %v809
    %842 = vmatprep.subr.mxu0 %v806
    %843 = vmatpush1.msra.mxu0 %v805
    %844 = vmatprep.subr.mxu0 %v802
    %845 = vmatpush1.msra.mxu0 %v801
    %846 = vmatprep.subr.mxu0 %v798
    %847 = vmatpush1.msra.mxu0 %v797
    %848 = vmatprep.subr.mxu0 %v794
    %849 = vmatpush1.msra.mxu0 %v793
    %850 = vmatprep.subr.mxu0 %v790
    %851 = vmatpush1.msra.mxu0 %v789
    %852 = vmatprep.subr.mxu0 %v786
    %853 = vmatpush1.msra.mxu0 %v785
    %854 = vmatprep.subr.mxu0 %v782
    %855 = vmatpush1.msra.mxu0 %v781
    %856 = vmatprep.subr.mxu0 %v778
    %857 = vmatpush1.msra.mxu0 %v777
    %858 = vmatprep.subr.mxu0 %v774
    %859 = vmatpush1.msra.mxu0 %v773
    %860 = vmatprep.subr.mxu0 %v770
    %861 = vmatpush1.msra.mxu0 %v769
    %862 = vmatprep.subr.mxu0 %v766
    %863 = vmatpush1.msra.mxu0 %v765
    %864 = vmatprep.subr.mxu0 0.0
    %865 = vmatpush2.msra.mxu0 0.0
    %866 = vmatprep.subr.mxu0 0.0
    %867 = vmatpush2.msra.mxu0 0.0
    %868 = vmatprep.subr.mxu0 0.0
    %869 = vmatpush2.msra.mxu0 0.0
    %870 = vmatprep.subr.mxu0 0.0
    %871 = vmatpush2.msra.mxu0 0.0
    %872 = vmatprep.subr.mxu0 0.0
    %873 = vmatpush2.msra.mxu0 0.0
    %874 = vmatprep.subr.mxu0 0.0
    %875 = vmatpush2.msra.mxu0 0.0
    %876 = vmatprep.subr.mxu0 0.0
    %877 = vmatpush2.msra.mxu0 0.0
    %878 = vmatprep.subr.mxu0 0.0
    %879 = vmatpush2.msra.mxu0 0.0
    %880 = vmatprep.subr.mxu0 0.0
    %881 = vmatpush2.msra.mxu0 0.0
    %882 = vmatprep.subr.mxu0 0.0
    %883 = vmatpush2.msra.mxu0 0.0
    %884 = vmatprep.subr.mxu0 0.0
    %885 = vmatpush2.msra.mxu0 0.0
    %886 = vmatprep.subr.mxu0 0.0
    %887 = vmatpush2.msra.mxu0 0.0
    %888 = vmatprep.subr.mxu0 0.0
    %889 = vmatpush2.msra.mxu0 0.0
    %890 = vmatprep.subr.mxu0 0.0
    %891 = vmatpush2.msra.mxu0 0.0
    %892 = vmatprep.subr.mxu0 0.0
    %893 = vmatpush2.msra.mxu0 0.0
    %894 = vmatprep.subr.mxu0 0.0
    %895 = vmatpush2.msra.mxu0 0.0
    %896 = vmatprep.mubr.f32.mxu0 0.0
    %897 = vmatmul.mubr.f32.gmra.mxu0 %v830
    %v898 = vpop.f32.mrf.mxu0
    %v899 = vadd.f32 0.0, %v898
    %v900 = vpop.f32.mrf.mxu0
    %v901 = vadd.f32 0.0, %v900
    %902 = vdwg.mxu0
    %903 = vmatprep.subr.mxu0 %v828
    %904 = vmatpush1.msra.mxu0 %v827
    %905 = vmatprep.subr.mxu0 %v824
    %906 = vmatpush1.msra.mxu0 %v823
    %907 = vmatprep.subr.mxu0 %v820
    %908 = vmatpush1.msra.mxu0 %v819
    %909 = vmatprep.subr.mxu0 %v816
    %910 = vmatpush1.msra.mxu0 %v815
    %911 = vmatprep.subr.mxu0 %v812
    %912 = vmatpush1.msra.mxu0 %v811
    %913 = vmatprep.subr.mxu0 %v808
    %914 = vmatpush1.msra.mxu0 %v807
    %915 = vmatprep.subr.mxu0 %v804
    %916 = vmatpush1.msra.mxu0 %v803
    %917 = vmatprep.subr.mxu0 %v800
    %918 = vmatpush1.msra.mxu0 %v799
    %919 = vmatprep.subr.mxu0 %v796
    %920 = vmatpush1.msra.mxu0 %v795
    %921 = vmatprep.subr.mxu0 %v792
    %922 = vmatpush1.msra.mxu0 %v791
    %923 = vmatprep.subr.mxu0 %v788
    %924 = vmatpush1.msra.mxu0 %v787
    %925 = vmatprep.subr.mxu0 %v784
    %926 = vmatpush1.msra.mxu0 %v783
    %927 = vmatprep.subr.mxu0 %v780
    %928 = vmatpush1.msra.mxu0 %v779
    %929 = vmatprep.subr.mxu0 %v776
    %930 = vmatpush1.msra.mxu0 %v775
    %931 = vmatprep.subr.mxu0 %v772
    %932 = vmatpush1.msra.mxu0 %v771
    %933 = vmatprep.subr.mxu0 %v768
    %934 = vmatpush1.msra.mxu0 %v767
    %935 = vmatprep.subr.mxu0 0.0
    %936 = vmatpush2.msra.mxu0 0.0
    %937 = vmatprep.subr.mxu0 0.0
    %938 = vmatpush2.msra.mxu0 0.0
    %939 = vmatprep.subr.mxu0 0.0
    %940 = vmatpush2.msra.mxu0 0.0
    %941 = vmatprep.subr.mxu0 0.0
    %942 = vmatpush2.msra.mxu0 0.0
    %943 = vmatprep.subr.mxu0 0.0
    %944 = vmatpush2.msra.mxu0 0.0
    %945 = vmatprep.subr.mxu0 0.0
    %946 = vmatpush2.msra.mxu0 0.0
    %947 = vmatprep.subr.mxu0 0.0
    %948 = vmatpush2.msra.mxu0 0.0
    %949 = vmatprep.subr.mxu0 0.0
    %950 = vmatpush2.msra.mxu0 0.0
    %951 = vmatprep.subr.mxu0 0.0
    %952 = vmatpush2.msra.mxu0 0.0
    %953 = vmatprep.subr.mxu0 0.0
    %954 = vmatpush2.msra.mxu0 0.0
    %955 = vmatprep.subr.mxu0 0.0
    %956 = vmatpush2.msra.mxu0 0.0
    %957 = vmatprep.subr.mxu0 0.0
    %958 = vmatpush2.msra.mxu0 0.0
    %959 = vmatprep.subr.mxu0 0.0
    %960 = vmatpush2.msra.mxu0 0.0
    %961 = vmatprep.subr.mxu0 0.0
    %962 = vmatpush2.msra.mxu0 0.0
    %963 = vmatprep.subr.mxu0 0.0
    %964 = vmatpush2.msra.mxu0 0.0
    %965 = vmatprep.subr.mxu0 0.0
    %966 = vmatpush2.msra.mxu0 0.0
    %967 = vmatprep.mubr.f32.mxu0 0.0
    %968 = vmatmul.mubr.f32.gmra.mxu0 %v830
    %v969 = vpop.f32.mrf.mxu0
    %v970 = vadd.f32 0.0, %v969
    %v971 = vpop.f32.mrf.mxu0
    %v972 = vadd.f32 0.0, %v971
    %973 = vdwg.mxu0
    %v978 = vrot.slane %v899, 4
    %v979 = vrot.slane %v901, 4
    %v980 = vrot.slane %v970, 4
    %v981 = vrot.slane %v972, 4
    %v986 = vadd.f32 %v191, %v978
    %v987 = vadd.f32 %v193, %v979
    %v988 = vadd.f32 %v268, %v980
    %v989 = vadd.f32 %v270, %v981
    %v990 = vxor.u32 %v986, 2147483648
    %v991 = vmul.f32 %v990, 1.442695
    %v992 = vpow.pop %v991
    %v993 = vadd.f32 %v992, 1.0
    %v994 = vrcp.pop %v993
    %v995 = vmul.f32 1.0, %v994
    %v996 = vxor.u32 %v987, 2147483648
    %v997 = vmul.f32 %v996, 1.442695
    %v998 = vpow.pop %v997
    %v999 = vadd.f32 %v998, 1.0
    %v1000 = vrcp.pop %v999
    %v1001 = vmul.f32 1.0, %v1000
    %v1002 = vtanh.pop %v988
    %v1003 = vxor.u32 %v989, 2147483648
    %v1004 = vmul.f32 %v1003, 1.442695
    %v1005 = vpow.pop %v1004
    %v1006 = vadd.f32 %v1005, 1.0
    %v1007 = vrcp.pop %v1006
    %v1008 = vmul.f32 1.0, %v1007
    %v1010 = vrot.slane %v761, 6
    %v1012 = vmul.f32 %v1001, %v1010
    %v1013 = vmul.f32 %v995, %v1002
    %v1014 = vadd.f32 %v1012, %v1013
    %v1015 = vtanh.pop %v1014
    %v1016 = vmul.f32 %v1008, %v1015
    %1017 = vst [vmem:[#allocation4] sm:$0x30] %v1016
    %v1018 = vld [vmem:[#allocation10] sm:$0xff]
    %v1019 = vld [vmem:[#allocation10 + $0x8] sm:$0xff]
    %v1020 = vld [vmem:[#allocation10 + $0x10] sm:$0xff]
    %v1021 = vld [vmem:[#allocation10 + $0x18] sm:$0xff]
    %v1022 = vld [vmem:[#allocation10 + $0x20] sm:$0xff]
    %v1023 = vld [vmem:[#allocation10 + $0x28] sm:$0xff]
    %v1024 = vld [vmem:[#allocation10 + $0x30] sm:$0xff]
    %v1025 = vld [vmem:[#allocation10 + $0x38] sm:$0xff]
    %v1026 = vld [vmem:[#allocation10 + $0x40] sm:$0xff]
    %v1027 = vld [vmem:[#allocation10 + $0x48] sm:$0xff]
    %v1028 = vld [vmem:[#allocation10 + $0x50] sm:$0xff]
    %v1029 = vld [vmem:[#allocation10 + $0x58] sm:$0xff]
    %v1030 = vld [vmem:[#allocation10 + $0x60] sm:$0xff]
    %v1031 = vld [vmem:[#allocation10 + $0x68] sm:$0xff]
    %v1032 = vld [vmem:[#allocation10 + $0x70] sm:$0xff]
    %v1033 = vld [vmem:[#allocation10 + $0x78] sm:$0xff]
    %v1034 = vld [vmem:[#allocation10 + $0x80] sm:$0xff]
    %v1035 = vld [vmem:[#allocation10 + $0x88] sm:$0xff]
    %v1036 = vld [vmem:[#allocation10 + $0x90] sm:$0xff]
    %v1037 = vld [vmem:[#allocation10 + $0x98] sm:$0xff]
    %v1038 = vld [vmem:[#allocation10 + $0xa0] sm:$0xff]
    %v1039 = vld [vmem:[#allocation10 + $0xa8] sm:$0xff]
    %v1040 = vld [vmem:[#allocation10 + $0xb0] sm:$0xff]
    %v1041 = vld [vmem:[#allocation10 + $0xb8] sm:$0xff]
    %v1042 = vld [vmem:[#allocation10 + $0xc0] sm:$0xff]
    %v1043 = vld [vmem:[#allocation10 + $0xc8] sm:$0xff]
    %v1044 = vld [vmem:[#allocation10 + $0xd0] sm:$0xff]
    %v1045 = vld [vmem:[#allocation10 + $0xd8] sm:$0xff]
    %v1046 = vld [vmem:[#allocation10 + $0xe0] sm:$0xff]
    %v1047 = vld [vmem:[#allocation10 + $0xe8] sm:$0xff]
    %v1048 = vld [vmem:[#allocation10 + $0xf0] sm:$0xff]
    %v1049 = vld [vmem:[#allocation10 + $0xf8] sm:$0xff]
    %v1050 = vld [vmem:[#allocation10 + $0x100] sm:$0xff]
    %v1051 = vld [vmem:[#allocation10 + $0x108] sm:$0xff]
    %v1052 = vld [vmem:[#allocation10 + $0x110] sm:$0xff]
    %v1053 = vld [vmem:[#allocation10 + $0x118] sm:$0xff]
    %v1054 = vld [vmem:[#allocation10 + $0x120] sm:$0xff]
    %v1055 = vld [vmem:[#allocation10 + $0x128] sm:$0xff]
    %v1056 = vld [vmem:[#allocation10 + $0x130] sm:$0xff]
    %v1057 = vld [vmem:[#allocation10 + $0x138] sm:$0xff]
    %v1058 = vld [vmem:[#allocation10 + $0x140] sm:$0xff]
    %v1059 = vld [vmem:[#allocation10 + $0x148] sm:$0xff]
    %v1060 = vld [vmem:[#allocation10 + $0x150] sm:$0xff]
    %v1061 = vld [vmem:[#allocation10 + $0x158] sm:$0xff]
    %v1062 = vld [vmem:[#allocation10 + $0x160] sm:$0xff]
    %v1063 = vld [vmem:[#allocation10 + $0x168] sm:$0xff]
    %v1064 = vld [vmem:[#allocation10 + $0x170] sm:$0xff]
    %v1065 = vld [vmem:[#allocation10 + $0x178] sm:$0xff]
    %v1066 = vld [vmem:[#allocation10 + $0x180] sm:$0xff]
    %v1067 = vld [vmem:[#allocation10 + $0x188] sm:$0xff]
    %v1068 = vld [vmem:[#allocation10 + $0x190] sm:$0xff]
    %v1069 = vld [vmem:[#allocation10 + $0x198] sm:$0xff]
    %v1070 = vld [vmem:[#allocation10 + $0x1a0] sm:$0xff]
    %v1071 = vld [vmem:[#allocation10 + $0x1a8] sm:$0xff]
    %v1072 = vld [vmem:[#allocation10 + $0x1b0] sm:$0xff]
    %v1073 = vld [vmem:[#allocation10 + $0x1b8] sm:$0xff]
    %v1074 = vld [vmem:[#allocation10 + $0x1c0] sm:$0xff]
    %v1075 = vld [vmem:[#allocation10 + $0x1c8] sm:$0xff]
    %v1076 = vld [vmem:[#allocation10 + $0x1d0] sm:$0xff]
    %v1077 = vld [vmem:[#allocation10 + $0x1d8] sm:$0xff]
    %v1078 = vld [vmem:[#allocation10 + $0x1e0] sm:$0xff]
    %v1079 = vld [vmem:[#allocation10 + $0x1e8] sm:$0xff]
    %v1080 = vld [vmem:[#allocation10 + $0x1f0] sm:$0xff]
    %v1081 = vld [vmem:[#allocation10 + $0x1f8] sm:$0xff]
    %v1083 = vrot.slane %v1016, 4
    %1085 = vmatprep.subr.mxu0 %v1079
    %1086 = vmatpush1.msra.mxu0 %v1078
    %1087 = vmatprep.subr.mxu0 %v1075
    %1088 = vmatpush1.msra.mxu0 %v1074
    %1089 = vmatprep.subr.mxu0 %v1071
    %1090 = vmatpush1.msra.mxu0 %v1070
    %1091 = vmatprep.subr.mxu0 %v1067
    %1092 = vmatpush1.msra.mxu0 %v1066
    %1093 = vmatprep.subr.mxu0 %v1063
    %1094 = vmatpush1.msra.mxu0 %v1062
    %1095 = vmatprep.subr.mxu0 %v1059
    %1096 = vmatpush1.msra.mxu0 %v1058
    %1097 = vmatprep.subr.mxu0 %v1055
    %1098 = vmatpush1.msra.mxu0 %v1054
    %1099 = vmatprep.subr.mxu0 %v1051
    %1100 = vmatpush1.msra.mxu0 %v1050
    %1101 = vmatprep.subr.mxu0 %v1047
    %1102 = vmatpush1.msra.mxu0 %v1046
    %1103 = vmatprep.subr.mxu0 %v1043
    %1104 = vmatpush1.msra.mxu0 %v1042
    %1105 = vmatprep.subr.mxu0 %v1039
    %1106 = vmatpush1.msra.mxu0 %v1038
    %1107 = vmatprep.subr.mxu0 %v1035
    %1108 = vmatpush1.msra.mxu0 %v1034
    %1109 = vmatprep.subr.mxu0 %v1031
    %1110 = vmatpush1.msra.mxu0 %v1030
    %1111 = vmatprep.subr.mxu0 %v1027
    %1112 = vmatpush1.msra.mxu0 %v1026
    %1113 = vmatprep.subr.mxu0 %v1023
    %1114 = vmatpush1.msra.mxu0 %v1022
    %1115 = vmatprep.subr.mxu0 %v1019
    %1116 = vmatpush1.msra.mxu0 %v1018
    %1117 = vmatprep.subr.mxu0 0.0
    %1118 = vmatpush2.msra.mxu0 0.0
    %1119 = vmatprep.subr.mxu0 0.0
    %1120 = vmatpush2.msra.mxu0 0.0
    %1121 = vmatprep.subr.mxu0 0.0
    %1122 = vmatpush2.msra.mxu0 0.0
    %1123 = vmatprep.subr.mxu0 0.0
    %1124 = vmatpush2.msra.mxu0 0.0
    %1125 = vmatprep.subr.mxu0 0.0
    %1126 = vmatpush2.msra.mxu0 0.0
    %1127 = vmatprep.subr.mxu0 0.0
    %1128 = vmatpush2.msra.mxu0 0.0
    %1129 = vmatprep.subr.mxu0 0.0
    %1130 = vmatpush2.msra.mxu0 0.0
    %1131 = vmatprep.subr.mxu0 0.0
    %1132 = vmatpush2.msra.mxu0 0.0
    %1133 = vmatprep.subr.mxu0 0.0
    %1134 = vmatpush2.msra.mxu0 0.0
    %1135 = vmatprep.subr.mxu0 0.0
    %1136 = vmatpush2.msra.mxu0 0.0
    %1137 = vmatprep.subr.mxu0 0.0
    %1138 = vmatpush2.msra.mxu0 0.0
    %1139 = vmatprep.subr.mxu0 0.0
    %1140 = vmatpush2.msra.mxu0 0.0
    %1141 = vmatprep.subr.mxu0 0.0
    %1142 = vmatpush2.msra.mxu0 0.0
    %1143 = vmatprep.subr.mxu0 0.0
    %1144 = vmatpush2.msra.mxu0 0.0
    %1145 = vmatprep.subr.mxu0 0.0
    %1146 = vmatpush2.msra.mxu0 0.0
    %1147 = vmatprep.subr.mxu0 0.0
    %1148 = vmatpush2.msra.mxu0 0.0
    %1149 = vmatprep.mubr.f32.mxu0 0.0
    %1150 = vmatmul.mubr.f32.gmra.mxu0 %v1083
    %v1151 = vpop.f32.mrf.mxu0
    %v1152 = vadd.f32 0.0, %v1151
    %v1153 = vpop.f32.mrf.mxu0
    %v1154 = vadd.f32 0.0, %v1153
    %1155 = vdwg.mxu0
    %1156 = vmatprep.subr.mxu0 %v1081
    %1157 = vmatpush1.msra.mxu0 %v1080
    %1158 = vmatprep.subr.mxu0 %v1077
    %1159 = vmatpush1.msra.mxu0 %v1076
    %1160 = vmatprep.subr.mxu0 %v1073
    %1161 = vmatpush1.msra.mxu0 %v1072
    %1162 = vmatprep.subr.mxu0 %v1069
    %1163 = vmatpush1.msra.mxu0 %v1068
    %1164 = vmatprep.subr.mxu0 %v1065
    %1165 = vmatpush1.msra.mxu0 %v1064
    %1166 = vmatprep.subr.mxu0 %v1061
    %1167 = vmatpush1.msra.mxu0 %v1060
    %1168 = vmatprep.subr.mxu0 %v1057
    %1169 = vmatpush1.msra.mxu0 %v1056
    %1170 = vmatprep.subr.mxu0 %v1053
    %1171 = vmatpush1.msra.mxu0 %v1052
    %1172 = vmatprep.subr.mxu0 %v1049
    %1173 = vmatpush1.msra.mxu0 %v1048
    %1174 = vmatprep.subr.mxu0 %v1045
    %1175 = vmatpush1.msra.mxu0 %v1044
    %1176 = vmatprep.subr.mxu0 %v1041
    %1177 = vmatpush1.msra.mxu0 %v1040
    %1178 = vmatprep.subr.mxu0 %v1037
    %1179 = vmatpush1.msra.mxu0 %v1036
    %1180 = vmatprep.subr.mxu0 %v1033
    %1181 = vmatpush1.msra.mxu0 %v1032
    %1182 = vmatprep.subr.mxu0 %v1029
    %1183 = vmatpush1.msra.mxu0 %v1028
    %1184 = vmatprep.subr.mxu0 %v1025
    %1185 = vmatpush1.msra.mxu0 %v1024
    %1186 = vmatprep.subr.mxu0 %v1021
    %1187 = vmatpush1.msra.mxu0 %v1020
    %1188 = vmatprep.subr.mxu0 0.0
    %1189 = vmatpush2.msra.mxu0 0.0
    %1190 = vmatprep.subr.mxu0 0.0
    %1191 = vmatpush2.msra.mxu0 0.0
    %1192 = vmatprep.subr.mxu0 0.0
    %1193 = vmatpush2.msra.mxu0 0.0
    %1194 = vmatprep.subr.mxu0 0.0
    %1195 = vmatpush2.msra.mxu0 0.0
    %1196 = vmatprep.subr.mxu0 0.0
    %1197 = vmatpush2.msra.mxu0 0.0
    %1198 = vmatprep.subr.mxu0 0.0
    %1199 = vmatpush2.msra.mxu0 0.0
    %1200 = vmatprep.subr.mxu0 0.0
    %1201 = vmatpush2.msra.mxu0 0.0
    %1202 = vmatprep.subr.mxu0 0.0
    %1203 = vmatpush2.msra.mxu0 0.0
    %1204 = vmatprep.subr.mxu0 0.0
    %1205 = vmatpush2.msra.mxu0 0.0
    %1206 = vmatprep.subr.mxu0 0.0
    %1207 = vmatpush2.msra.mxu0 0.0
    %1208 = vmatprep.subr.mxu0 0.0
    %1209 = vmatpush2.msra.mxu0 0.0
    %1210 = vmatprep.subr.mxu0 0.0
    %1211 = vmatpush2.msra.mxu0 0.0
    %1212 = vmatprep.subr.mxu0 0.0
    %1213 = vmatpush2.msra.mxu0 0.0
    %1214 = vmatprep.subr.mxu0 0.0
    %1215 = vmatpush2.msra.mxu0 0.0
    %1216 = vmatprep.subr.mxu0 0.0
    %1217 = vmatpush2.msra.mxu0 0.0
    %1218 = vmatprep.subr.mxu0 0.0
    %1219 = vmatpush2.msra.mxu0 0.0
    %1220 = vmatprep.mubr.f32.mxu0 0.0
    %1221 = vmatmul.mubr.f32.gmra.mxu0 %v1083
    %v1222 = vpop.f32.mrf.mxu0
    %v1223 = vadd.f32 0.0, %v1222
    %v1224 = vpop.f32.mrf.mxu0
    %v1225 = vadd.f32 0.0, %v1224
    %1226 = vdwg.mxu0
    %v1231 = vrot.slane %v1152, 2
    %v1232 = vrot.slane %v1154, 2
    %v1233 = vrot.slane %v1223, 2
    %v1234 = vrot.slane %v1225, 2
    %v1239 = vadd.f32 %v191, %v1231
    %v1240 = vadd.f32 %v193, %v1232
    %v1241 = vadd.f32 %v268, %v1233
    %v1242 = vadd.f32 %v270, %v1234
    %v1243 = vxor.u32 %v1239, 2147483648
    %v1244 = vmul.f32 %v1243, 1.442695
    %v1245 = vpow.pop %v1244
    %v1246 = vadd.f32 %v1245, 1.0
    %v1247 = vrcp.pop %v1246
    %v1248 = vmul.f32 1.0, %v1247
    %v1249 = vxor.u32 %v1240, 2147483648
    %v1250 = vmul.f32 %v1249, 1.442695
    %v1251 = vpow.pop %v1250
    %v1252 = vadd.f32 %v1251, 1.0
    %v1253 = vrcp.pop %v1252
    %v1254 = vmul.f32 1.0, %v1253
    %v1255 = vtanh.pop %v1241
    %v1256 = vxor.u32 %v1242, 2147483648
    %v1257 = vmul.f32 %v1256, 1.442695
    %v1258 = vpow.pop %v1257
    %v1259 = vadd.f32 %v1258, 1.0
    %v1260 = vrcp.pop %v1259
    %v1261 = vmul.f32 1.0, %v1260
    %v1263 = vrot.slane %v1014, 6
    %v1265 = vmul.f32 %v1254, %v1263
    %v1266 = vmul.f32 %v1248, %v1255
    %v1267 = vadd.f32 %v1265, %v1266
    %v1268 = vtanh.pop %v1267
    %v1269 = vmul.f32 %v1261, %v1268
    %1270 = vst [vmem:[#allocation4] sm:$0xc0] %v1269
    %v1271 = vld [vmem:[#allocation10] sm:$0xff]
    %v1272 = vld [vmem:[#allocation10 + $0x8] sm:$0xff]
    %v1273 = vld [vmem:[#allocation10 + $0x10] sm:$0xff]
    %v1274 = vld [vmem:[#allocation10 + $0x18] sm:$0xff]
    %v1275 = vld [vmem:[#allocation10 + $0x20] sm:$0xff]
    %v1276 = vld [vmem:[#allocation10 + $0x28] sm:$0xff]
    %v1277 = vld [vmem:[#allocation10 + $0x30] sm:$0xff]
    %v1278 = vld [vmem:[#allocation10 + $0x38] sm:$0xff]
    %v1279 = vld [vmem:[#allocation10 + $0x40] sm:$0xff]
    %v1280 = vld [vmem:[#allocation10 + $0x48] sm:$0xff]
    %v1281 = vld [vmem:[#allocation10 + $0x50] sm:$0xff]
    %v1282 = vld [vmem:[#allocation10 + $0x58] sm:$0xff]
    %v1283 = vld [vmem:[#allocation10 + $0x60] sm:$0xff]
    %v1284 = vld [vmem:[#allocation10 + $0x68] sm:$0xff]
    %v1285 = vld [vmem:[#allocation10 + $0x70] sm:$0xff]
    %v1286 = vld [vmem:[#allocation10 + $0x78] sm:$0xff]
    %v1287 = vld [vmem:[#allocation10 + $0x80] sm:$0xff]
    %v1288 = vld [vmem:[#allocation10 + $0x88] sm:$0xff]
    %v1289 = vld [vmem:[#allocation10 + $0x90] sm:$0xff]
    %v1290 = vld [vmem:[#allocation10 + $0x98] sm:$0xff]
    %v1291 = vld [vmem:[#allocation10 + $0xa0] sm:$0xff]
    %v1292 = vld [vmem:[#allocation10 + $0xa8] sm:$0xff]
    %v1293 = vld [vmem:[#allocation10 + $0xb0] sm:$0xff]
    %v1294 = vld [vmem:[#allocation10 + $0xb8] sm:$0xff]
    %v1295 = vld [vmem:[#allocation10 + $0xc0] sm:$0xff]
    %v1296 = vld [vmem:[#allocation10 + $0xc8] sm:$0xff]
    %v1297 = vld [vmem:[#allocation10 + $0xd0] sm:$0xff]
    %v1298 = vld [vmem:[#allocation10 + $0xd8] sm:$0xff]
    %v1299 = vld [vmem:[#allocation10 + $0xe0] sm:$0xff]
    %v1300 = vld [vmem:[#allocation10 + $0xe8] sm:$0xff]
    %v1301 = vld [vmem:[#allocation10 + $0xf0] sm:$0xff]
    %v1302 = vld [vmem:[#allocation10 + $0xf8] sm:$0xff]
    %v1303 = vld [vmem:[#allocation10 + $0x100] sm:$0xff]
    %v1304 = vld [vmem:[#allocation10 + $0x108] sm:$0xff]
    %v1305 = vld [vmem:[#allocation10 + $0x110] sm:$0xff]
    %v1306 = vld [vmem:[#allocation10 + $0x118] sm:$0xff]
    %v1307 = vld [vmem:[#allocation10 + $0x120] sm:$0xff]
    %v1308 = vld [vmem:[#allocation10 + $0x128] sm:$0xff]
    %v1309 = vld [vmem:[#allocation10 + $0x130] sm:$0xff]
    %v1310 = vld [vmem:[#allocation10 + $0x138] sm:$0xff]
    %v1311 = vld [vmem:[#allocation10 + $0x140] sm:$0xff]
    %v1312 = vld [vmem:[#allocation10 + $0x148] sm:$0xff]
    %v1313 = vld [vmem:[#allocation10 + $0x150] sm:$0xff]
    %v1314 = vld [vmem:[#allocation10 + $0x158] sm:$0xff]
    %v1315 = vld [vmem:[#allocation10 + $0x160] sm:$0xff]
    %v1316 = vld [vmem:[#allocation10 + $0x168] sm:$0xff]
    %v1317 = vld [vmem:[#allocation10 + $0x170] sm:$0xff]
    %v1318 = vld [vmem:[#allocation10 + $0x178] sm:$0xff]
    %v1319 = vld [vmem:[#allocation10 + $0x180] sm:$0xff]
    %v1320 = vld [vmem:[#allocation10 + $0x188] sm:$0xff]
    %v1321 = vld [vmem:[#allocation10 + $0x190] sm:$0xff]
    %v1322 = vld [vmem:[#allocation10 + $0x198] sm:$0xff]
    %v1323 = vld [vmem:[#allocation10 + $0x1a0] sm:$0xff]
    %v1324 = vld [vmem:[#allocation10 + $0x1a8] sm:$0xff]
    %v1325 = vld [vmem:[#allocation10 + $0x1b0] sm:$0xff]
    %v1326 = vld [vmem:[#allocation10 + $0x1b8] sm:$0xff]
    %v1327 = vld [vmem:[#allocation10 + $0x1c0] sm:$0xff]
    %v1328 = vld [vmem:[#allocation10 + $0x1c8] sm:$0xff]
    %v1329 = vld [vmem:[#allocation10 + $0x1d0] sm:$0xff]
    %v1330 = vld [vmem:[#allocation10 + $0x1d8] sm:$0xff]
    %v1331 = vld [vmem:[#allocation10 + $0x1e0] sm:$0xff]
    %v1332 = vld [vmem:[#allocation10 + $0x1e8] sm:$0xff]
    %v1333 = vld [vmem:[#allocation10 + $0x1f0] sm:$0xff]
    %v1334 = vld [vmem:[#allocation10 + $0x1f8] sm:$0xff]
    %v1336 = vrot.slane %v1269, 6
    %1338 = vmatprep.subr.mxu0 %v1332
    %1339 = vmatpush1.msra.mxu0 %v1331
    %1340 = vmatprep.subr.mxu0 %v1328
    %1341 = vmatpush1.msra.mxu0 %v1327
    %1342 = vmatprep.subr.mxu0 %v1324
    %1343 = vmatpush1.msra.mxu0 %v1323
    %1344 = vmatprep.subr.mxu0 %v1320
    %1345 = vmatpush1.msra.mxu0 %v1319
    %1346 = vmatprep.subr.mxu0 %v1316
    %1347 = vmatpush1.msra.mxu0 %v1315
    %1348 = vmatprep.subr.mxu0 %v1312
    %1349 = vmatpush1.msra.mxu0 %v1311
    %1350 = vmatprep.subr.mxu0 %v1308
    %1351 = vmatpush1.msra.mxu0 %v1307
    %1352 = vmatprep.subr.mxu0 %v1304
    %1353 = vmatpush1.msra.mxu0 %v1303
    %1354 = vmatprep.subr.mxu0 %v1300
    %1355 = vmatpush1.msra.mxu0 %v1299
    %1356 = vmatprep.subr.mxu0 %v1296
    %1357 = vmatpush1.msra.mxu0 %v1295
    %1358 = vmatprep.subr.mxu0 %v1292
    %1359 = vmatpush1.msra.mxu0 %v1291
    %1360 = vmatprep.subr.mxu0 %v1288
    %1361 = vmatpush1.msra.mxu0 %v1287
    %1362 = vmatprep.subr.mxu0 %v1284
    %1363 = vmatpush1.msra.mxu0 %v1283
    %1364 = vmatprep.subr.mxu0 %v1280
    %1365 = vmatpush1.msra.mxu0 %v1279
    %1366 = vmatprep.subr.mxu0 %v1276
    %1367 = vmatpush1.msra.mxu0 %v1275
    %1368 = vmatprep.subr.mxu0 %v1272
    %1369 = vmatpush1.msra.mxu0 %v1271
    %1370 = vmatprep.subr.mxu0 0.0
    %1371 = vmatpush2.msra.mxu0 0.0
    %1372 = vmatprep.subr.mxu0 0.0
    %1373 = vmatpush2.msra.mxu0 0.0
    %1374 = vmatprep.subr.mxu0 0.0
    %1375 = vmatpush2.msra.mxu0 0.0
    %1376 = vmatprep.subr.mxu0 0.0
    %1377 = vmatpush2.msra.mxu0 0.0
    %1378 = vmatprep.subr.mxu0 0.0
    %1379 = vmatpush2.msra.mxu0 0.0
    %1380 = vmatprep.subr.mxu0 0.0
    %1381 = vmatpush2.msra.mxu0 0.0
    %1382 = vmatprep.subr.mxu0 0.0
    %1383 = vmatpush2.msra.mxu0 0.0
    %1384 = vmatprep.subr.mxu0 0.0
    %1385 = vmatpush2.msra.mxu0 0.0
    %1386 = vmatprep.subr.mxu0 0.0
    %1387 = vmatpush2.msra.mxu0 0.0
    %1388 = vmatprep.subr.mxu0 0.0
    %1389 = vmatpush2.msra.mxu0 0.0
    %1390 = vmatprep.subr.mxu0 0.0
    %1391 = vmatpush2.msra.mxu0 0.0
    %1392 = vmatprep.subr.mxu0 0.0
    %1393 = vmatpush2.msra.mxu0 0.0
    %1394 = vmatprep.subr.mxu0 0.0
    %1395 = vmatpush2.msra.mxu0 0.0
    %1396 = vmatprep.subr.mxu0 0.0
    %1397 = vmatpush2.msra.mxu0 0.0
    %1398 = vmatprep.subr.mxu0 0.0
    %1399 = vmatpush2.msra.mxu0 0.0
    %1400 = vmatprep.subr.mxu0 0.0
    %1401 = vmatpush2.msra.mxu0 0.0
    %1402 = vmatprep.mubr.f32.mxu0 0.0
    %1403 = vmatmul.mubr.f32.gmra.mxu0 %v1336
    %v1404 = vpop.f32.mrf.mxu0
    %v1405 = vadd.f32 0.0, %v1404
    %v1406 = vpop.f32.mrf.mxu0
    %v1407 = vadd.f32 0.0, %v1406
    %1408 = vdwg.mxu0
    %1409 = vmatprep.subr.mxu0 %v1334
    %1410 = vmatpush1.msra.mxu0 %v1333
    %1411 = vmatprep.subr.mxu0 %v1330
    %1412 = vmatpush1.msra.mxu0 %v1329
    %1413 = vmatprep.subr.mxu0 %v1326
    %1414 = vmatpush1.msra.mxu0 %v1325
    %1415 = vmatprep.subr.mxu0 %v1322
    %1416 = vmatpush1.msra.mxu0 %v1321
    %1417 = vmatprep.subr.mxu0 %v1318
    %1418 = vmatpush1.msra.mxu0 %v1317
    %1419 = vmatprep.subr.mxu0 %v1314
    %1420 = vmatpush1.msra.mxu0 %v1313
    %1421 = vmatprep.subr.mxu0 %v1310
    %1422 = vmatpush1.msra.mxu0 %v1309
    %1423 = vmatprep.subr.mxu0 %v1306
    %1424 = vmatpush1.msra.mxu0 %v1305
    %1425 = vmatprep.subr.mxu0 %v1302
    %1426 = vmatpush1.msra.mxu0 %v1301
    %1427 = vmatprep.subr.mxu0 %v1298
    %1428 = vmatpush1.msra.mxu0 %v1297
    %1429 = vmatprep.subr.mxu0 %v1294
    %1430 = vmatpush1.msra.mxu0 %v1293
    %1431 = vmatprep.subr.mxu0 %v1290
    %1432 = vmatpush1.msra.mxu0 %v1289
    %1433 = vmatprep.subr.mxu0 %v1286
    %1434 = vmatpush1.msra.mxu0 %v1285
    %1435 = vmatprep.subr.mxu0 %v1282
    %1436 = vmatpush1.msra.mxu0 %v1281
    %1437 = vmatprep.subr.mxu0 %v1278
    %1438 = vmatpush1.msra.mxu0 %v1277
    %1439 = vmatprep.subr.mxu0 %v1274
    %1440 = vmatpush1.msra.mxu0 %v1273
    %1441 = vmatprep.subr.mxu0 0.0
    %1442 = vmatpush2.msra.mxu0 0.0
    %1443 = vmatprep.subr.mxu0 0.0
    %1444 = vmatpush2.msra.mxu0 0.0
    %1445 = vmatprep.subr.mxu0 0.0
    %1446 = vmatpush2.msra.mxu0 0.0
    %1447 = vmatprep.subr.mxu0 0.0
    %1448 = vmatpush2.msra.mxu0 0.0
    %1449 = vmatprep.subr.mxu0 0.0
    %1450 = vmatpush2.msra.mxu0 0.0
    %1451 = vmatprep.subr.mxu0 0.0
    %1452 = vmatpush2.msra.mxu0 0.0
    %1453 = vmatprep.subr.mxu0 0.0
    %1454 = vmatpush2.msra.mxu0 0.0
    %1455 = vmatprep.subr.mxu0 0.0
    %1456 = vmatpush2.msra.mxu0 0.0
    %1457 = vmatprep.subr.mxu0 0.0
    %1458 = vmatpush2.msra.mxu0 0.0
    %1459 = vmatprep.subr.mxu0 0.0
    %1460 = vmatpush2.msra.mxu0 0.0
    %1461 = vmatprep.subr.mxu0 0.0
    %1462 = vmatpush2.msra.mxu0 0.0
    %1463 = vmatprep.subr.mxu0 0.0
    %1464 = vmatpush2.msra.mxu0 0.0
    %1465 = vmatprep.subr.mxu0 0.0
    %1466 = vmatpush2.msra.mxu0 0.0
    %1467 = vmatprep.subr.mxu0 0.0
    %1468 = vmatpush2.msra.mxu0 0.0
    %1469 = vmatprep.subr.mxu0 0.0
    %1470 = vmatpush2.msra.mxu0 0.0
    %1471 = vmatprep.subr.mxu0 0.0
    %1472 = vmatpush2.msra.mxu0 0.0
    %1473 = vmatprep.mubr.f32.mxu0 0.0
    %1474 = vmatmul.mubr.f32.gmra.mxu0 %v1336
    %v1475 = vpop.f32.mrf.mxu0
    %v1476 = vadd.f32 0.0, %v1475
    %v1477 = vpop.f32.mrf.mxu0
    %v1478 = vadd.f32 0.0, %v1477
    %1479 = vdwg.mxu0
    %v1480 = vadd.f32 %v197, %v1405
    %v1481 = vadd.f32 %v199, %v1407
    %v1482 = vadd.f32 %v274, %v1476
    %v1483 = vadd.f32 %v276, %v1478
    %v1484 = vxor.u32 %v1480, 2147483648
    %v1485 = vmul.f32 %v1484, 1.442695
    %v1486 = vpow.pop %v1485
    %v1487 = vadd.f32 %v1486, 1.0
    %v1488 = vrcp.pop %v1487
    %v1489 = vmul.f32 1.0, %v1488
    %v1490 = vxor.u32 %v1481, 2147483648
    %v1491 = vmul.f32 %v1490, 1.442695
    %v1492 = vpow.pop %v1491
    %v1493 = vadd.f32 %v1492, 1.0
    %v1494 = vrcp.pop %v1493
    %v1495 = vmul.f32 1.0, %v1494
    %v1496 = vtanh.pop %v1482
    %v1497 = vxor.u32 %v1483, 2147483648
    %v1498 = vmul.f32 %v1497, 1.442695
    %v1499 = vpow.pop %v1498
    %v1500 = vadd.f32 %v1499, 1.0
    %v1501 = vrcp.pop %v1500
    %v1502 = vmul.f32 1.0, %v1501
    %v1504 = vrot.slane %v1267, 6
    %v1506 = vmul.f32 %v1495, %v1504
    %v1507 = vmul.f32 %v1489, %v1496
    %v1508 = vadd.f32 %v1506, %v1507
    %v1509 = vtanh.pop %v1508
    %v1510 = vmul.f32 %v1502, %v1509
    %1511 = vst [vmem:[#allocation4 + $0x8] sm:$0x3] %v1510
    %v1512 = vld [vmem:[#allocation10] sm:$0xff]
    %v1513 = vld [vmem:[#allocation10 + $0x8] sm:$0xff]
    %v1514 = vld [vmem:[#allocation10 + $0x10] sm:$0xff]
    %v1515 = vld [vmem:[#allocation10 + $0x18] sm:$0xff]
    %v1516 = vld [vmem:[#allocation10 + $0x20] sm:$0xff]
    %v1517 = vld [vmem:[#allocation10 + $0x28] sm:$0xff]
    %v1518 = vld [vmem:[#allocation10 + $0x30] sm:$0xff]
    %v1519 = vld [vmem:[#allocation10 + $0x38] sm:$0xff]
    %v1520 = vld [vmem:[#allocation10 + $0x40] sm:$0xff]
    %v1521 = vld [vmem:[#allocation10 + $0x48] sm:$0xff]
    %v1522 = vld [vmem:[#allocation10 + $0x50] sm:$0xff]
    %v1523 = vld [vmem:[#allocation10 + $0x58] sm:$0xff]
    %v1524 = vld [vmem:[#allocation10 + $0x60] sm:$0xff]
    %v1525 = vld [vmem:[#allocation10 + $0x68] sm:$0xff]
    %v1526 = vld [vmem:[#allocation10 + $0x70] sm:$0xff]
    %v1527 = vld [vmem:[#allocation10 + $0x78] sm:$0xff]
    %v1528 = vld [vmem:[#allocation10 + $0x80] sm:$0xff]
    %v1529 = vld [vmem:[#allocation10 + $0x88] sm:$0xff]
    %v1530 = vld [vmem:[#allocation10 + $0x90] sm:$0xff]
    %v1531 = vld [vmem:[#allocation10 + $0x98] sm:$0xff]
    %v1532 = vld [vmem:[#allocation10 + $0xa0] sm:$0xff]
    %v1533 = vld [vmem:[#allocation10 + $0xa8] sm:$0xff]
    %v1534 = vld [vmem:[#allocation10 + $0xb0] sm:$0xff]
    %v1535 = vld [vmem:[#allocation10 + $0xb8] sm:$0xff]
    %v1536 = vld [vmem:[#allocation10 + $0xc0] sm:$0xff]
    %v1537 = vld [vmem:[#allocation10 + $0xc8] sm:$0xff]
    %v1538 = vld [vmem:[#allocation10 + $0xd0] sm:$0xff]
    %v1539 = vld [vmem:[#allocation10 + $0xd8] sm:$0xff]
    %v1540 = vld [vmem:[#allocation10 + $0xe0] sm:$0xff]
    %v1541 = vld [vmem:[#allocation10 + $0xe8] sm:$0xff]
    %v1542 = vld [vmem:[#allocation10 + $0xf0] sm:$0xff]
    %v1543 = vld [vmem:[#allocation10 + $0xf8] sm:$0xff]
    %v1544 = vld [vmem:[#allocation10 + $0x100] sm:$0xff]
    %v1545 = vld [vmem:[#allocation10 + $0x108] sm:$0xff]
    %v1546 = vld [vmem:[#allocation10 + $0x110] sm:$0xff]
    %v1547 = vld [vmem:[#allocation10 + $0x118] sm:$0xff]
    %v1548 = vld [vmem:[#allocation10 + $0x120] sm:$0xff]
    %v1549 = vld [vmem:[#allocation10 + $0x128] sm:$0xff]
    %v1550 = vld [vmem:[#allocation10 + $0x130] sm:$0xff]
    %v1551 = vld [vmem:[#allocation10 + $0x138] sm:$0xff]
    %v1552 = vld [vmem:[#allocation10 + $0x140] sm:$0xff]
    %v1553 = vld [vmem:[#allocation10 + $0x148] sm:$0xff]
    %v1554 = vld [vmem:[#allocation10 + $0x150] sm:$0xff]
    %v1555 = vld [vmem:[#allocation10 + $0x158] sm:$0xff]
    %v1556 = vld [vmem:[#allocation10 + $0x160] sm:$0xff]
    %v1557 = vld [vmem:[#allocation10 + $0x168] sm:$0xff]
    %v1558 = vld [vmem:[#allocation10 + $0x170] sm:$0xff]
    %v1559 = vld [vmem:[#allocation10 + $0x178] sm:$0xff]
    %v1560 = vld [vmem:[#allocation10 + $0x180] sm:$0xff]
    %v1561 = vld [vmem:[#allocation10 + $0x188] sm:$0xff]
    %v1562 = vld [vmem:[#allocation10 + $0x190] sm:$0xff]
    %v1563 = vld [vmem:[#allocation10 + $0x198] sm:$0xff]
    %v1564 = vld [vmem:[#allocation10 + $0x1a0] sm:$0xff]
    %v1565 = vld [vmem:[#allocation10 + $0x1a8] sm:$0xff]
    %v1566 = vld [vmem:[#allocation10 + $0x1b0] sm:$0xff]
    %v1567 = vld [vmem:[#allocation10 + $0x1b8] sm:$0xff]
    %v1568 = vld [vmem:[#allocation10 + $0x1c0] sm:$0xff]
    %v1569 = vld [vmem:[#allocation10 + $0x1c8] sm:$0xff]
    %v1570 = vld [vmem:[#allocation10 + $0x1d0] sm:$0xff]
    %v1571 = vld [vmem:[#allocation10 + $0x1d8] sm:$0xff]
    %v1572 = vld [vmem:[#allocation10 + $0x1e0] sm:$0xff]
    %v1573 = vld [vmem:[#allocation10 + $0x1e8] sm:$0xff]
    %v1574 = vld [vmem:[#allocation10 + $0x1f0] sm:$0xff]
    %v1575 = vld [vmem:[#allocation10 + $0x1f8] sm:$0xff]
    %1576 = vmatprep.subr.mxu0 %v1573
    %1577 = vmatpush1.msra.mxu0 %v1572
    %1578 = vmatprep.subr.mxu0 %v1569
    %1579 = vmatpush1.msra.mxu0 %v1568
    %1580 = vmatprep.subr.mxu0 %v1565
    %1581 = vmatpush1.msra.mxu0 %v1564
    %1582 = vmatprep.subr.mxu0 %v1561
    %1583 = vmatpush1.msra.mxu0 %v1560
    %1584 = vmatprep.subr.mxu0 %v1557
    %1585 = vmatpush1.msra.mxu0 %v1556
    %1586 = vmatprep.subr.mxu0 %v1553
    %1587 = vmatpush1.msra.mxu0 %v1552
    %1588 = vmatprep.subr.mxu0 %v1549
    %1589 = vmatpush1.msra.mxu0 %v1548
    %1590 = vmatprep.subr.mxu0 %v1545
    %1591 = vmatpush1.msra.mxu0 %v1544
    %1592 = vmatprep.subr.mxu0 %v1541
    %1593 = vmatpush1.msra.mxu0 %v1540
    %1594 = vmatprep.subr.mxu0 %v1537
    %1595 = vmatpush1.msra.mxu0 %v1536
    %1596 = vmatprep.subr.mxu0 %v1533
    %1597 = vmatpush1.msra.mxu0 %v1532
    %1598 = vmatprep.subr.mxu0 %v1529
    %1599 = vmatpush1.msra.mxu0 %v1528
    %1600 = vmatprep.subr.mxu0 %v1525
    %1601 = vmatpush1.msra.mxu0 %v1524
    %1602 = vmatprep.subr.mxu0 %v1521
    %1603 = vmatpush1.msra.mxu0 %v1520
    %1604 = vmatprep.subr.mxu0 %v1517
    %1605 = vmatpush1.msra.mxu0 %v1516
    %1606 = vmatprep.subr.mxu0 %v1513
    %1607 = vmatpush1.msra.mxu0 %v1512
    %1608 = vmatprep.subr.mxu0 0.0
    %1609 = vmatpush2.msra.mxu0 0.0
    %1610 = vmatprep.subr.mxu0 0.0
    %1611 = vmatpush2.msra.mxu0 0.0
    %1612 = vmatprep.subr.mxu0 0.0
    %1613 = vmatpush2.msra.mxu0 0.0
    %1614 = vmatprep.subr.mxu0 0.0
    %1615 = vmatpush2.msra.mxu0 0.0
    %1616 = vmatprep.subr.mxu0 0.0
    %1617 = vmatpush2.msra.mxu0 0.0
    %1618 = vmatprep.subr.mxu0 0.0
    %1619 = vmatpush2.msra.mxu0 0.0
    %1620 = vmatprep.subr.mxu0 0.0
    %1621 = vmatpush2.msra.mxu0 0.0
    %1622 = vmatprep.subr.mxu0 0.0
    %1623 = vmatpush2.msra.mxu0 0.0
    %1624 = vmatprep.subr.mxu0 0.0
    %1625 = vmatpush2.msra.mxu0 0.0
    %1626 = vmatprep.subr.mxu0 0.0
    %1627 = vmatpush2.msra.mxu0 0.0
    %1628 = vmatprep.subr.mxu0 0.0
    %1629 = vmatpush2.msra.mxu0 0.0
    %1630 = vmatprep.subr.mxu0 0.0
    %1631 = vmatpush2.msra.mxu0 0.0
    %1632 = vmatprep.subr.mxu0 0.0
    %1633 = vmatpush2.msra.mxu0 0.0
    %1634 = vmatprep.subr.mxu0 0.0
    %1635 = vmatpush2.msra.mxu0 0.0
    %1636 = vmatprep.subr.mxu0 0.0
    %1637 = vmatpush2.msra.mxu0 0.0
    %1638 = vmatprep.subr.mxu0 0.0
    %1639 = vmatpush2.msra.mxu0 0.0
    %1640 = vmatprep.mubr.f32.mxu0 0.0
    %1641 = vmatmul.mubr.f32.gmra.mxu0 %v1510
    %v1642 = vpop.f32.mrf.mxu0
    %v1643 = vadd.f32 0.0, %v1642
    %v1644 = vpop.f32.mrf.mxu0
    %v1645 = vadd.f32 0.0, %v1644
    %1646 = vdwg.mxu0
    %1647 = vmatprep.subr.mxu0 %v1575
    %1648 = vmatpush1.msra.mxu0 %v1574
    %1649 = vmatprep.subr.mxu0 %v1571
    %1650 = vmatpush1.msra.mxu0 %v1570
    %1651 = vmatprep.subr.mxu0 %v1567
    %1652 = vmatpush1.msra.mxu0 %v1566
    %1653 = vmatprep.subr.mxu0 %v1563
    %1654 = vmatpush1.msra.mxu0 %v1562
    %1655 = vmatprep.subr.mxu0 %v1559
    %1656 = vmatpush1.msra.mxu0 %v1558
    %1657 = vmatprep.subr.mxu0 %v1555
    %1658 = vmatpush1.msra.mxu0 %v1554
    %1659 = vmatprep.subr.mxu0 %v1551
    %1660 = vmatpush1.msra.mxu0 %v1550
    %1661 = vmatprep.subr.mxu0 %v1547
    %1662 = vmatpush1.msra.mxu0 %v1546
    %1663 = vmatprep.subr.mxu0 %v1543
    %1664 = vmatpush1.msra.mxu0 %v1542
    %1665 = vmatprep.subr.mxu0 %v1539
    %1666 = vmatpush1.msra.mxu0 %v1538
    %1667 = vmatprep.subr.mxu0 %v1535
    %1668 = vmatpush1.msra.mxu0 %v1534
    %1669 = vmatprep.subr.mxu0 %v1531
    %1670 = vmatpush1.msra.mxu0 %v1530
    %1671 = vmatprep.subr.mxu0 %v1527
    %1672 = vmatpush1.msra.mxu0 %v1526
    %1673 = vmatprep.subr.mxu0 %v1523
    %1674 = vmatpush1.msra.mxu0 %v1522
    %1675 = vmatprep.subr.mxu0 %v1519
    %1676 = vmatpush1.msra.mxu0 %v1518
    %1677 = vmatprep.subr.mxu0 %v1515
    %1678 = vmatpush1.msra.mxu0 %v1514
    %1679 = vmatprep.subr.mxu0 0.0
    %1680 = vmatpush2.msra.mxu0 0.0
    %1681 = vmatprep.subr.mxu0 0.0
    %1682 = vmatpush2.msra.mxu0 0.0
    %1683 = vmatprep.subr.mxu0 0.0
    %1684 = vmatpush2.msra.mxu0 0.0
    %1685 = vmatprep.subr.mxu0 0.0
    %1686 = vmatpush2.msra.mxu0 0.0
    %1687 = vmatprep.subr.mxu0 0.0
    %1688 = vmatpush2.msra.mxu0 0.0
    %1689 = vmatprep.subr.mxu0 0.0
    %1690 = vmatpush2.msra.mxu0 0.0
    %1691 = vmatprep.subr.mxu0 0.0
    %1692 = vmatpush2.msra.mxu0 0.0
    %1693 = vmatprep.subr.mxu0 0.0
    %1694 = vmatpush2.msra.mxu0 0.0
    %1695 = vmatprep.subr.mxu0 0.0
    %1696 = vmatpush2.msra.mxu0 0.0
    %1697 = vmatprep.subr.mxu0 0.0
    %1698 = vmatpush2.msra.mxu0 0.0
    %1699 = vmatprep.subr.mxu0 0.0
    %1700 = vmatpush2.msra.mxu0 0.0
    %1701 = vmatprep.subr.mxu0 0.0
    %1702 = vmatpush2.msra.mxu0 0.0
    %1703 = vmatprep.subr.mxu0 0.0
    %1704 = vmatpush2.msra.mxu0 0.0
    %1705 = vmatprep.subr.mxu0 0.0
    %1706 = vmatpush2.msra.mxu0 0.0
    %1707 = vmatprep.subr.mxu0 0.0
    %1708 = vmatpush2.msra.mxu0 0.0
    %1709 = vmatprep.subr.mxu0 0.0
    %1710 = vmatpush2.msra.mxu0 0.0
    %1711 = vmatprep.mubr.f32.mxu0 0.0
    %1712 = vmatmul.mubr.f32.gmra.mxu0 %v1510
    %v1713 = vpop.f32.mrf.mxu0
    %v1714 = vadd.f32 0.0, %v1713
    %v1715 = vpop.f32.mrf.mxu0
    %v1716 = vadd.f32 0.0, %v1715
    %1717 = vdwg.mxu0
    %v1722 = vrot.slane %v1643, 6
    %v1723 = vrot.slane %v1645, 6
    %v1724 = vrot.slane %v1714, 6
    %v1725 = vrot.slane %v1716, 6
    %v1730 = vadd.f32 %v197, %v1722
    %v1731 = vadd.f32 %v199, %v1723
    %v1732 = vadd.f32 %v274, %v1724
    %v1733 = vadd.f32 %v276, %v1725
    %v1734 = vxor.u32 %v1730, 2147483648
    %v1735 = vmul.f32 %v1734, 1.442695
    %v1736 = vpow.pop %v1735
    %v1737 = vadd.f32 %v1736, 1.0
    %v1738 = vrcp.pop %v1737
    %v1739 = vmul.f32 1.0, %v1738
    %v1740 = vxor.u32 %v1731, 2147483648
    %v1741 = vmul.f32 %v1740, 1.442695
    %v1742 = vpow.pop %v1741
    %v1743 = vadd.f32 %v1742, 1.0
    %v1744 = vrcp.pop %v1743
    %v1745 = vmul.f32 1.0, %v1744
    %v1746 = vtanh.pop %v1732
    %v1747 = vxor.u32 %v1733, 2147483648
    %v1748 = vmul.f32 %v1747, 1.442695
    %v1749 = vpow.pop %v1748
    %v1750 = vadd.f32 %v1749, 1.0
    %v1751 = vrcp.pop %v1750
    %v1752 = vmul.f32 1.0, %v1751
    %v1754 = vrot.slane %v1508, 6
    %v1756 = vmul.f32 %v1745, %v1754
    %v1757 = vmul.f32 %v1739, %v1746
    %v1758 = vadd.f32 %v1756, %v1757
    %v1759 = vtanh.pop %v1758
    %v1760 = vmul.f32 %v1752, %v1759
    %1761 = vst [vmem:[#allocation4 + $0x8] sm:$0xc] %v1760
    %v1762 = vld [vmem:[#allocation10] sm:$0xff]
    %v1763 = vld [vmem:[#allocation10 + $0x8] sm:$0xff]
    %v1764 = vld [vmem:[#allocation10 + $0x10] sm:$0xff]
    %v1765 = vld [vmem:[#allocation10 + $0x18] sm:$0xff]
    %v1766 = vld [vmem:[#allocation10 + $0x20] sm:$0xff]
    %v1767 = vld [vmem:[#allocation10 + $0x28] sm:$0xff]
    %v1768 = vld [vmem:[#allocation10 + $0x30] sm:$0xff]
    %v1769 = vld [vmem:[#allocation10 + $0x38] sm:$0xff]
    %v1770 = vld [vmem:[#allocation10 + $0x40] sm:$0xff]
    %v1771 = vld [vmem:[#allocation10 + $0x48] sm:$0xff]
    %v1772 = vld [vmem:[#allocation10 + $0x50] sm:$0xff]
    %v1773 = vld [vmem:[#allocation10 + $0x58] sm:$0xff]
    %v1774 = vld [vmem:[#allocation10 + $0x60] sm:$0xff]
    %v1775 = vld [vmem:[#allocation10 + $0x68] sm:$0xff]
    %v1776 = vld [vmem:[#allocation10 + $0x70] sm:$0xff]
    %v1777 = vld [vmem:[#allocation10 + $0x78] sm:$0xff]
    %v1778 = vld [vmem:[#allocation10 + $0x80] sm:$0xff]
    %v1779 = vld [vmem:[#allocation10 + $0x88] sm:$0xff]
    %v1780 = vld [vmem:[#allocation10 + $0x90] sm:$0xff]
    %v1781 = vld [vmem:[#allocation10 + $0x98] sm:$0xff]
    %v1782 = vld [vmem:[#allocation10 + $0xa0] sm:$0xff]
    %v1783 = vld [vmem:[#allocation10 + $0xa8] sm:$0xff]
    %v1784 = vld [vmem:[#allocation10 + $0xb0] sm:$0xff]
    %v1785 = vld [vmem:[#allocation10 + $0xb8] sm:$0xff]
    %v1786 = vld [vmem:[#allocation10 + $0xc0] sm:$0xff]
    %v1787 = vld [vmem:[#allocation10 + $0xc8] sm:$0xff]
    %v1788 = vld [vmem:[#allocation10 + $0xd0] sm:$0xff]
    %v1789 = vld [vmem:[#allocation10 + $0xd8] sm:$0xff]
    %v1790 = vld [vmem:[#allocation10 + $0xe0] sm:$0xff]
    %v1791 = vld [vmem:[#allocation10 + $0xe8] sm:$0xff]
    %v1792 = vld [vmem:[#allocation10 + $0xf0] sm:$0xff]
    %v1793 = vld [vmem:[#allocation10 + $0xf8] sm:$0xff]
    %v1794 = vld [vmem:[#allocation10 + $0x100] sm:$0xff]
    %v1795 = vld [vmem:[#allocation10 + $0x108] sm:$0xff]
    %v1796 = vld [vmem:[#allocation10 + $0x110] sm:$0xff]
    %v1797 = vld [vmem:[#allocation10 + $0x118] sm:$0xff]
    %v1798 = vld [vmem:[#allocation10 + $0x120] sm:$0xff]
    %v1799 = vld [vmem:[#allocation10 + $0x128] sm:$0xff]
    %v1800 = vld [vmem:[#allocation10 + $0x130] sm:$0xff]
    %v1801 = vld [vmem:[#allocation10 + $0x138] sm:$0xff]
    %v1802 = vld [vmem:[#allocation10 + $0x140] sm:$0xff]
    %v1803 = vld [vmem:[#allocation10 + $0x148] sm:$0xff]
    %v1804 = vld [vmem:[#allocation10 + $0x150] sm:$0xff]
    %v1805 = vld [vmem:[#allocation10 + $0x158] sm:$0xff]
    %v1806 = vld [vmem:[#allocation10 + $0x160] sm:$0xff]
    %v1807 = vld [vmem:[#allocation10 + $0x168] sm:$0xff]
    %v1808 = vld [vmem:[#allocation10 + $0x170] sm:$0xff]
    %v1809 = vld [vmem:[#allocation10 + $0x178] sm:$0xff]
    %v1810 = vld [vmem:[#allocation10 + $0x180] sm:$0xff]
    %v1811 = vld [vmem:[#allocation10 + $0x188] sm:$0xff]
    %v1812 = vld [vmem:[#allocation10 + $0x190] sm:$0xff]
    %v1813 = vld [vmem:[#allocation10 + $0x198] sm:$0xff]
    %v1814 = vld [vmem:[#allocation10 + $0x1a0] sm:$0xff]
    %v1815 = vld [vmem:[#allocation10 + $0x1a8] sm:$0xff]
    %v1816 = vld [vmem:[#allocation10 + $0x1b0] sm:$0xff]
    %v1817 = vld [vmem:[#allocation10 + $0x1b8] sm:$0xff]
    %v1818 = vld [vmem:[#allocation10 + $0x1c0] sm:$0xff]
    %v1819 = vld [vmem:[#allocation10 + $0x1c8] sm:$0xff]
    %v1820 = vld [vmem:[#allocation10 + $0x1d0] sm:$0xff]
    %v1821 = vld [vmem:[#allocation10 + $0x1d8] sm:$0xff]
    %v1822 = vld [vmem:[#allocation10 + $0x1e0] sm:$0xff]
    %v1823 = vld [vmem:[#allocation10 + $0x1e8] sm:$0xff]
    %v1824 = vld [vmem:[#allocation10 + $0x1f0] sm:$0xff]
    %v1825 = vld [vmem:[#allocation10 + $0x1f8] sm:$0xff]
    %v1827 = vrot.slane %v1760, 2
    %1829 = vmatprep.subr.mxu0 %v1823
    %1830 = vmatpush1.msra.mxu0 %v1822
    %1831 = vmatprep.subr.mxu0 %v1819
    %1832 = vmatpush1.msra.mxu0 %v1818
    %1833 = vmatprep.subr.mxu0 %v1815
    %1834 = vmatpush1.msra.mxu0 %v1814
    %1835 = vmatprep.subr.mxu0 %v1811
    %1836 = vmatpush1.msra.mxu0 %v1810
    %1837 = vmatprep.subr.mxu0 %v1807
    %1838 = vmatpush1.msra.mxu0 %v1806
    %1839 = vmatprep.subr.mxu0 %v1803
    %1840 = vmatpush1.msra.mxu0 %v1802
    %1841 = vmatprep.subr.mxu0 %v1799
    %1842 = vmatpush1.msra.mxu0 %v1798
    %1843 = vmatprep.subr.mxu0 %v1795
    %1844 = vmatpush1.msra.mxu0 %v1794
    %1845 = vmatprep.subr.mxu0 %v1791
    %1846 = vmatpush1.msra.mxu0 %v1790
    %1847 = vmatprep.subr.mxu0 %v1787
    %1848 = vmatpush1.msra.mxu0 %v1786
    %1849 = vmatprep.subr.mxu0 %v1783
    %1850 = vmatpush1.msra.mxu0 %v1782
    %1851 = vmatprep.subr.mxu0 %v1779
    %1852 = vmatpush1.msra.mxu0 %v1778
    %1853 = vmatprep.subr.mxu0 %v1775
    %1854 = vmatpush1.msra.mxu0 %v1774
    %1855 = vmatprep.subr.mxu0 %v1771
    %1856 = vmatpush1.msra.mxu0 %v1770
    %1857 = vmatprep.subr.mxu0 %v1767
    %1858 = vmatpush1.msra.mxu0 %v1766
    %1859 = vmatprep.subr.mxu0 %v1763
    %1860 = vmatpush1.msra.mxu0 %v1762
    %1861 = vmatprep.subr.mxu0 0.0
    %1862 = vmatpush2.msra.mxu0 0.0
    %1863 = vmatprep.subr.mxu0 0.0
    %1864 = vmatpush2.msra.mxu0 0.0
    %1865 = vmatprep.subr.mxu0 0.0
    %1866 = vmatpush2.msra.mxu0 0.0
    %1867 = vmatprep.subr.mxu0 0.0
    %1868 = vmatpush2.msra.mxu0 0.0
    %1869 = vmatprep.subr.mxu0 0.0
    %1870 = vmatpush2.msra.mxu0 0.0
    %1871 = vmatprep.subr.mxu0 0.0
    %1872 = vmatpush2.msra.mxu0 0.0
    %1873 = vmatprep.subr.mxu0 0.0
    %1874 = vmatpush2.msra.mxu0 0.0
    %1875 = vmatprep.subr.mxu0 0.0
    %1876 = vmatpush2.msra.mxu0 0.0
    %1877 = vmatprep.subr.mxu0 0.0
    %1878 = vmatpush2.msra.mxu0 0.0
    %1879 = vmatprep.subr.mxu0 0.0
    %1880 = vmatpush2.msra.mxu0 0.0
    %1881 = vmatprep.subr.mxu0 0.0
    %1882 = vmatpush2.msra.mxu0 0.0
    %1883 = vmatprep.subr.mxu0 0.0
    %1884 = vmatpush2.msra.mxu0 0.0
    %1885 = vmatprep.subr.mxu0 0.0
    %1886 = vmatpush2.msra.mxu0 0.0
    %1887 = vmatprep.subr.mxu0 0.0
    %1888 = vmatpush2.msra.mxu0 0.0
    %1889 = vmatprep.subr.mxu0 0.0
    %1890 = vmatpush2.msra.mxu0 0.0
    %1891 = vmatprep.subr.mxu0 0.0
    %1892 = vmatpush2.msra.mxu0 0.0
    %1893 = vmatprep.mubr.f32.mxu0 0.0
    %1894 = vmatmul.mubr.f32.gmra.mxu0 %v1827
    %v1895 = vpop.f32.mrf.mxu0
    %v1896 = vadd.f32 0.0, %v1895
    %v1897 = vpop.f32.mrf.mxu0
    %v1898 = vadd.f32 0.0, %v1897
    %1899 = vdwg.mxu0
    %1900 = vmatprep.subr.mxu0 %v1825
    %1901 = vmatpush1.msra.mxu0 %v1824
    %1902 = vmatprep.subr.mxu0 %v1821
    %1903 = vmatpush1.msra.mxu0 %v1820
    %1904 = vmatprep.subr.mxu0 %v1817
    %1905 = vmatpush1.msra.mxu0 %v1816
    %1906 = vmatprep.subr.mxu0 %v1813
    %1907 = vmatpush1.msra.mxu0 %v1812
    %1908 = vmatprep.subr.mxu0 %v1809
    %1909 = vmatpush1.msra.mxu0 %v1808
    %1910 = vmatprep.subr.mxu0 %v1805
    %1911 = vmatpush1.msra.mxu0 %v1804
    %1912 = vmatprep.subr.mxu0 %v1801
    %1913 = vmatpush1.msra.mxu0 %v1800
    %1914 = vmatprep.subr.mxu0 %v1797
    %1915 = vmatpush1.msra.mxu0 %v1796
    %1916 = vmatprep.subr.mxu0 %v1793
    %1917 = vmatpush1.msra.mxu0 %v1792
    %1918 = vmatprep.subr.mxu0 %v1789
    %1919 = vmatpush1.msra.mxu0 %v1788
    %1920 = vmatprep.subr.mxu0 %v1785
    %1921 = vmatpush1.msra.mxu0 %v1784
    %1922 = vmatprep.subr.mxu0 %v1781
    %1923 = vmatpush1.msra.mxu0 %v1780
    %1924 = vmatprep.subr.mxu0 %v1777
    %1925 = vmatpush1.msra.mxu0 %v1776
    %1926 = vmatprep.subr.mxu0 %v1773
    %1927 = vmatpush1.msra.mxu0 %v1772
    %1928 = vmatprep.subr.mxu0 %v1769
    %1929 = vmatpush1.msra.mxu0 %v1768
    %1930 = vmatprep.subr.mxu0 %v1765
    %1931 = vmatpush1.msra.mxu0 %v1764
    %1932 = vmatprep.subr.mxu0 0.0
    %1933 = vmatpush2.msra.mxu0 0.0
    %1934 = vmatprep.subr.mxu0 0.0
    %1935 = vmatpush2.msra.mxu0 0.0
    %1936 = vmatprep.subr.mxu0 0.0
    %1937 = vmatpush2.msra.mxu0 0.0
    %1938 = vmatprep.subr.mxu0 0.0
    %1939 = vmatpush2.msra.mxu0 0.0
    %1940 = vmatprep.subr.mxu0 0.0
    %1941 = vmatpush2.msra.mxu0 0.0
    %1942 = vmatprep.subr.mxu0 0.0
    %1943 = vmatpush2.msra.mxu0 0.0
    %1944 = vmatprep.subr.mxu0 0.0
    %1945 = vmatpush2.msra.mxu0 0.0
    %1946 = vmatprep.subr.mxu0 0.0
    %1947 = vmatpush2.msra.mxu0 0.0
    %1948 = vmatprep.subr.mxu0 0.0
    %1949 = vmatpush2.msra.mxu0 0.0
    %1950 = vmatprep.subr.mxu0 0.0
    %1951 = vmatpush2.msra.mxu0 0.0
    %1952 = vmatprep.subr.mxu0 0.0
    %1953 = vmatpush2.msra.mxu0 0.0
    %1954 = vmatprep.subr.mxu0 0.0
    %1955 = vmatpush2.msra.mxu0 0.0
    %1956 = vmatprep.subr.mxu0 0.0
    %1957 = vmatpush2.msra.mxu0 0.0
    %1958 = vmatprep.subr.mxu0 0.0
    %1959 = vmatpush2.msra.mxu0 0.0
    %1960 = vmatprep.subr.mxu0 0.0
    %1961 = vmatpush2.msra.mxu0 0.0
    %1962 = vmatprep.subr.mxu0 0.0
    %1963 = vmatpush2.msra.mxu0 0.0
    %1964 = vmatprep.mubr.f32.mxu0 0.0
    %1965 = vmatmul.mubr.f32.gmra.mxu0 %v1827
    %v1966 = vpop.f32.mrf.mxu0
    %v1967 = vadd.f32 0.0, %v1966
    %v1968 = vpop.f32.mrf.mxu0
    %v1969 = vadd.f32 0.0, %v1968
    %1970 = vdwg.mxu0
    %v1975 = vrot.slane %v1896, 4
    %v1976 = vrot.slane %v1898, 4
    %v1977 = vrot.slane %v1967, 4
    %v1978 = vrot.slane %v1969, 4
    %v1983 = vadd.f32 %v197, %v1975
    %v1984 = vadd.f32 %v199, %v1976
    %v1985 = vadd.f32 %v274, %v1977
    %v1986 = vadd.f32 %v276, %v1978
    %v1987 = vxor.u32 %v1983, 2147483648
    %v1988 = vmul.f32 %v1987, 1.442695
    %v1989 = vpow.pop %v1988
    %v1990 = vadd.f32 %v1989, 1.0
    %v1991 = vrcp.pop %v1990
    %v1992 = vmul.f32 1.0, %v1991
    %v1993 = vxor.u32 %v1984, 2147483648
    %v1994 = vmul.f32 %v1993, 1.442695
    %v1995 = vpow.pop %v1994
    %v1996 = vadd.f32 %v1995, 1.0
    %v1997 = vrcp.pop %v1996
    %v1998 = vmul.f32 1.0, %v1997
    %v1999 = vtanh.pop %v1985
    %v2000 = vxor.u32 %v1986, 2147483648
    %v2001 = vmul.f32 %v2000, 1.442695
    %v2002 = vpow.pop %v2001
    %v2003 = vadd.f32 %v2002, 1.0
    %v2004 = vrcp.pop %v2003
    %v2005 = vmul.f32 1.0, %v2004
    %v2007 = vrot.slane %v1758, 6
    %v2009 = vmul.f32 %v1998, %v2007
    %v2010 = vmul.f32 %v1992, %v1999
    %v2011 = vadd.f32 %v2009, %v2010
    %v2012 = vtanh.pop %v2011
    %v2013 = vmul.f32 %v2005, %v2012
    %2014 = vst [vmem:[#allocation4 + $0x8] sm:$0x30] %v2013
    %v2015 = vld [vmem:[#allocation10] sm:$0xff]
    %v2016 = vld [vmem:[#allocation10 + $0x8] sm:$0xff]
    %v2017 = vld [vmem:[#allocation10 + $0x10] sm:$0xff]
    %v2018 = vld [vmem:[#allocation10 + $0x18] sm:$0xff]
    %v2019 = vld [vmem:[#allocation10 + $0x20] sm:$0xff]
    %v2020 = vld [vmem:[#allocation10 + $0x28] sm:$0xff]
    %v2021 = vld [vmem:[#allocation10 + $0x30] sm:$0xff]
    %v2022 = vld [vmem:[#allocation10 + $0x38] sm:$0xff]
    %v2023 = vld [vmem:[#allocation10 + $0x40] sm:$0xff]
    %v2024 = vld [vmem:[#allocation10 + $0x48] sm:$0xff]
    %v2025 = vld [vmem:[#allocation10 + $0x50] sm:$0xff]
    %v2026 = vld [vmem:[#allocation10 + $0x58] sm:$0xff]
    %v2027 = vld [vmem:[#allocation10 + $0x60] sm:$0xff]
    %v2028 = vld [vmem:[#allocation10 + $0x68] sm:$0xff]
    %v2029 = vld [vmem:[#allocation10 + $0x70] sm:$0xff]
    %v2030 = vld [vmem:[#allocation10 + $0x78] sm:$0xff]
    %v2031 = vld [vmem:[#allocation10 + $0x80] sm:$0xff]
    %v2032 = vld [vmem:[#allocation10 + $0x88] sm:$0xff]
    %v2033 = vld [vmem:[#allocation10 + $0x90] sm:$0xff]
    %v2034 = vld [vmem:[#allocation10 + $0x98] sm:$0xff]
    %v2035 = vld [vmem:[#allocation10 + $0xa0] sm:$0xff]
    %v2036 = vld [vmem:[#allocation10 + $0xa8] sm:$0xff]
    %v2037 = vld [vmem:[#allocation10 + $0xb0] sm:$0xff]
    %v2038 = vld [vmem:[#allocation10 + $0xb8] sm:$0xff]
    %v2039 = vld [vmem:[#allocation10 + $0xc0] sm:$0xff]
    %v2040 = vld [vmem:[#allocation10 + $0xc8] sm:$0xff]
    %v2041 = vld [vmem:[#allocation10 + $0xd0] sm:$0xff]
    %v2042 = vld [vmem:[#allocation10 + $0xd8] sm:$0xff]
    %v2043 = vld [vmem:[#allocation10 + $0xe0] sm:$0xff]
    %v2044 = vld [vmem:[#allocation10 + $0xe8] sm:$0xff]
    %v2045 = vld [vmem:[#allocation10 + $0xf0] sm:$0xff]
    %v2046 = vld [vmem:[#allocation10 + $0xf8] sm:$0xff]
    %v2047 = vld [vmem:[#allocation10 + $0x100] sm:$0xff]
    %v2048 = vld [vmem:[#allocation10 + $0x108] sm:$0xff]
    %v2049 = vld [vmem:[#allocation10 + $0x110] sm:$0xff]
    %v2050 = vld [vmem:[#allocation10 + $0x118] sm:$0xff]
    %v2051 = vld [vmem:[#allocation10 + $0x120] sm:$0xff]
    %v2052 = vld [vmem:[#allocation10 + $0x128] sm:$0xff]
    %v2053 = vld [vmem:[#allocation10 + $0x130] sm:$0xff]
    %v2054 = vld [vmem:[#allocation10 + $0x138] sm:$0xff]
    %v2055 = vld [vmem:[#allocation10 + $0x140] sm:$0xff]
    %v2056 = vld [vmem:[#allocation10 + $0x148] sm:$0xff]
    %v2057 = vld [vmem:[#allocation10 + $0x150] sm:$0xff]
    %v2058 = vld [vmem:[#allocation10 + $0x158] sm:$0xff]
    %v2059 = vld [vmem:[#allocation10 + $0x160] sm:$0xff]
    %v2060 = vld [vmem:[#allocation10 + $0x168] sm:$0xff]
    %v2061 = vld [vmem:[#allocation10 + $0x170] sm:$0xff]
    %v2062 = vld [vmem:[#allocation10 + $0x178] sm:$0xff]
    %v2063 = vld [vmem:[#allocation10 + $0x180] sm:$0xff]
    %v2064 = vld [vmem:[#allocation10 + $0x188] sm:$0xff]
    %v2065 = vld [vmem:[#allocation10 + $0x190] sm:$0xff]
    %v2066 = vld [vmem:[#allocation10 + $0x198] sm:$0xff]
    %v2067 = vld [vmem:[#allocation10 + $0x1a0] sm:$0xff]
    %v2068 = vld [vmem:[#allocation10 + $0x1a8] sm:$0xff]
    %v2069 = vld [vmem:[#allocation10 + $0x1b0] sm:$0xff]
    %v2070 = vld [vmem:[#allocation10 + $0x1b8] sm:$0xff]
    %v2071 = vld [vmem:[#allocation10 + $0x1c0] sm:$0xff]
    %v2072 = vld [vmem:[#allocation10 + $0x1c8] sm:$0xff]
    %v2073 = vld [vmem:[#allocation10 + $0x1d0] sm:$0xff]
    %v2074 = vld [vmem:[#allocation10 + $0x1d8] sm:$0xff]
    %v2075 = vld [vmem:[#allocation10 + $0x1e0] sm:$0xff]
    %v2076 = vld [vmem:[#allocation10 + $0x1e8] sm:$0xff]
    %v2077 = vld [vmem:[#allocation10 + $0x1f0] sm:$0xff]
    %v2078 = vld [vmem:[#allocation10 + $0x1f8] sm:$0xff]
    %v2080 = vrot.slane %v2013, 4
    %2082 = vmatprep.subr.mxu0 %v2076
    %2083 = vmatpush1.msra.mxu0 %v2075
    %2084 = vmatprep.subr.mxu0 %v2072
    %2085 = vmatpush1.msra.mxu0 %v2071
    %2086 = vmatprep.subr.mxu0 %v2068
    %2087 = vmatpush1.msra.mxu0 %v2067
    %2088 = vmatprep.subr.mxu0 %v2064
    %2089 = vmatpush1.msra.mxu0 %v2063
    %2090 = vmatprep.subr.mxu0 %v2060
    %2091 = vmatpush1.msra.mxu0 %v2059
    %2092 = vmatprep.subr.mxu0 %v2056
    %2093 = vmatpush1.msra.mxu0 %v2055
    %2094 = vmatprep.subr.mxu0 %v2052
    %2095 = vmatpush1.msra.mxu0 %v2051
    %2096 = vmatprep.subr.mxu0 %v2048
    %2097 = vmatpush1.msra.mxu0 %v2047
    %2098 = vmatprep.subr.mxu0 %v2044
    %2099 = vmatpush1.msra.mxu0 %v2043
    %2100 = vmatprep.subr.mxu0 %v2040
    %2101 = vmatpush1.msra.mxu0 %v2039
    %2102 = vmatprep.subr.mxu0 %v2036
    %2103 = vmatpush1.msra.mxu0 %v2035
    %2104 = vmatprep.subr.mxu0 %v2032
    %2105 = vmatpush1.msra.mxu0 %v2031
    %2106 = vmatprep.subr.mxu0 %v2028
    %2107 = vmatpush1.msra.mxu0 %v2027
    %2108 = vmatprep.subr.mxu0 %v2024
    %2109 = vmatpush1.msra.mxu0 %v2023
    %2110 = vmatprep.subr.mxu0 %v2020
    %2111 = vmatpush1.msra.mxu0 %v2019
    %2112 = vmatprep.subr.mxu0 %v2016
    %2113 = vmatpush1.msra.mxu0 %v2015
    %2114 = vmatprep.subr.mxu0 0.0
    %2115 = vmatpush2.msra.mxu0 0.0
    %2116 = vmatprep.subr.mxu0 0.0
    %2117 = vmatpush2.msra.mxu0 0.0
    %2118 = vmatprep.subr.mxu0 0.0
    %2119 = vmatpush2.msra.mxu0 0.0
    %2120 = vmatprep.subr.mxu0 0.0
    %2121 = vmatpush2.msra.mxu0 0.0
    %2122 = vmatprep.subr.mxu0 0.0
    %2123 = vmatpush2.msra.mxu0 0.0
    %2124 = vmatprep.subr.mxu0 0.0
    %2125 = vmatpush2.msra.mxu0 0.0
    %2126 = vmatprep.subr.mxu0 0.0
    %2127 = vmatpush2.msra.mxu0 0.0
    %2128 = vmatprep.subr.mxu0 0.0
    %2129 = vmatpush2.msra.mxu0 0.0
    %2130 = vmatprep.subr.mxu0 0.0
    %2131 = vmatpush2.msra.mxu0 0.0
    %2132 = vmatprep.subr.mxu0 0.0
    %2133 = vmatpush2.msra.mxu0 0.0
    %2134 = vmatprep.subr.mxu0 0.0
    %2135 = vmatpush2.msra.mxu0 0.0
    %2136 = vmatprep.subr.mxu0 0.0
    %2137 = vmatpush2.msra.mxu0 0.0
    %2138 = vmatprep.subr.mxu0 0.0
    %2139 = vmatpush2.msra.mxu0 0.0
    %2140 = vmatprep.subr.mxu0 0.0
    %2141 = vmatpush2.msra.mxu0 0.0
    %2142 = vmatprep.subr.mxu0 0.0
    %2143 = vmatpush2.msra.mxu0 0.0
    %2144 = vmatprep.subr.mxu0 0.0
    %2145 = vmatpush2.msra.mxu0 0.0
    %2146 = vmatprep.mubr.f32.mxu0 0.0
    %2147 = vmatmul.mubr.f32.gmra.mxu0 %v2080
    %v2148 = vpop.f32.mrf.mxu0
    %v2149 = vadd.f32 0.0, %v2148
    %v2150 = vpop.f32.mrf.mxu0
    %v2151 = vadd.f32 0.0, %v2150
    %2152 = vdwg.mxu0
    %2153 = vmatprep.subr.mxu0 %v2078
    %2154 = vmatpush1.msra.mxu0 %v2077
    %2155 = vmatprep.subr.mxu0 %v2074
    %2156 = vmatpush1.msra.mxu0 %v2073
    %2157 = vmatprep.subr.mxu0 %v2070
    %2158 = vmatpush1.msra.mxu0 %v2069
    %2159 = vmatprep.subr.mxu0 %v2066
    %2160 = vmatpush1.msra.mxu0 %v2065
    %2161 = vmatprep.subr.mxu0 %v2062
    %2162 = vmatpush1.msra.mxu0 %v2061
    %2163 = vmatprep.subr.mxu0 %v2058
    %2164 = vmatpush1.msra.mxu0 %v2057
    %2165 = vmatprep.subr.mxu0 %v2054
    %2166 = vmatpush1.msra.mxu0 %v2053
    %2167 = vmatprep.subr.mxu0 %v2050
    %2168 = vmatpush1.msra.mxu0 %v2049
    %2169 = vmatprep.subr.mxu0 %v2046
    %2170 = vmatpush1.msra.mxu0 %v2045
    %2171 = vmatprep.subr.mxu0 %v2042
    %2172 = vmatpush1.msra.mxu0 %v2041
    %2173 = vmatprep.subr.mxu0 %v2038
    %2174 = vmatpush1.msra.mxu0 %v2037
    %2175 = vmatprep.subr.mxu0 %v2034
    %2176 = vmatpush1.msra.mxu0 %v2033
    %2177 = vmatprep.subr.mxu0 %v2030
    %2178 = vmatpush1.msra.mxu0 %v2029
    %2179 = vmatprep.subr.mxu0 %v2026
    %2180 = vmatpush1.msra.mxu0 %v2025
    %2181 = vmatprep.subr.mxu0 %v2022
    %2182 = vmatpush1.msra.mxu0 %v2021
    %2183 = vmatprep.subr.mxu0 %v2018
    %2184 = vmatpush1.msra.mxu0 %v2017
    %2185 = vmatprep.subr.mxu0 0.0
    %2186 = vmatpush2.msra.mxu0 0.0
    %2187 = vmatprep.subr.mxu0 0.0
    %2188 = vmatpush2.msra.mxu0 0.0
    %2189 = vmatprep.subr.mxu0 0.0
    %2190 = vmatpush2.msra.mxu0 0.0
    %2191 = vmatprep.subr.mxu0 0.0
    %2192 = vmatpush2.msra.mxu0 0.0
    %2193 = vmatprep.subr.mxu0 0.0
    %2194 = vmatpush2.msra.mxu0 0.0
    %2195 = vmatprep.subr.mxu0 0.0
    %2196 = vmatpush2.msra.mxu0 0.0
    %2197 = vmatprep.subr.mxu0 0.0
    %2198 = vmatpush2.msra.mxu0 0.0
    %2199 = vmatprep.subr.mxu0 0.0
    %2200 = vmatpush2.msra.mxu0 0.0
    %2201 = vmatprep.subr.mxu0 0.0
    %2202 = vmatpush2.msra.mxu0 0.0
    %2203 = vmatprep.subr.mxu0 0.0
    %2204 = vmatpush2.msra.mxu0 0.0
    %2205 = vmatprep.subr.mxu0 0.0
    %2206 = vmatpush2.msra.mxu0 0.0
    %2207 = vmatprep.subr.mxu0 0.0
    %2208 = vmatpush2.msra.mxu0 0.0
    %2209 = vmatprep.subr.mxu0 0.0
    %2210 = vmatpush2.msra.mxu0 0.0
    %2211 = vmatprep.subr.mxu0 0.0
    %2212 = vmatpush2.msra.mxu0 0.0
    %2213 = vmatprep.subr.mxu0 0.0
    %2214 = vmatpush2.msra.mxu0 0.0
    %2215 = vmatprep.subr.mxu0 0.0
    %2216 = vmatpush2.msra.mxu0 0.0
    %2217 = vmatprep.mubr.f32.mxu0 0.0
    %2218 = vmatmul.mubr.f32.gmra.mxu0 %v2080
    %v2219 = vpop.f32.mrf.mxu0
    %v2220 = vadd.f32 0.0, %v2219
    %v2221 = vpop.f32.mrf.mxu0
    %v2222 = vadd.f32 0.0, %v2221
    %2223 = vdwg.mxu0
    %v2228 = vrot.slane %v2149, 2
    %v2229 = vrot.slane %v2151, 2
    %v2230 = vrot.slane %v2220, 2
    %v2231 = vrot.slane %v2222, 2
    %v2236 = vadd.f32 %v197, %v2228
    %v2237 = vadd.f32 %v199, %v2229
    %v2238 = vadd.f32 %v274, %v2230
    %v2239 = vadd.f32 %v276, %v2231
    %v2240 = vxor.u32 %v2236, 2147483648
    %v2241 = vmul.f32 %v2240, 1.442695
    %v2242 = vpow.pop %v2241
    %v2243 = vadd.f32 %v2242, 1.0
    %v2244 = vrcp.pop %v2243
    %v2245 = vmul.f32 1.0, %v2244
    %v2246 = vxor.u32 %v2237, 2147483648
    %v2247 = vmul.f32 %v2246, 1.442695
    %v2248 = vpow.pop %v2247
    %v2249 = vadd.f32 %v2248, 1.0
    %v2250 = vrcp.pop %v2249
    %v2251 = vmul.f32 1.0, %v2250
    %v2252 = vtanh.pop %v2238
    %v2253 = vxor.u32 %v2239, 2147483648
    %v2254 = vmul.f32 %v2253, 1.442695
    %v2255 = vpow.pop %v2254
    %v2256 = vadd.f32 %v2255, 1.0
    %v2257 = vrcp.pop %v2256
    %v2258 = vmul.f32 1.0, %v2257
    %v2260 = vrot.slane %v2011, 6
    %v2262 = vmul.f32 %v2251, %v2260
    %v2263 = vmul.f32 %v2245, %v2252
    %v2264 = vadd.f32 %v2262, %v2263
    %v2265 = vtanh.pop %v2264
    %v2266 = vmul.f32 %v2258, %v2265
    %2267 = vst [vmem:[#allocation4 + $0x8] sm:$0xc0] %v2266
    %2268 = vst [vmem:[#allocation2 - $0x6] sm:$0xc0] %v2266
    %2269 = vst [vmem:[#allocation3 - $0x6] sm:$0xc0] %v2264
    %v2270 = vld [vmem:[#allocation4] sm:$0xff]
    %v2271 = vld [vmem:[#allocation4 + $0x8] sm:$0xff]
    %v2272 = vld [vmem:[#allocation11] sm:$0xff]
    %v2273 = vld [vmem:[#allocation11 + $0x8] sm:$0xff]
    %v2274 = vld [vmem:[#allocation11 + $0x10] sm:$0xff]
    %v2275 = vld [vmem:[#allocation11 + $0x18] sm:$0xff]
    %v2276 = vld [vmem:[#allocation11 + $0x20] sm:$0xff]
    %v2277 = vld [vmem:[#allocation11 + $0x28] sm:$0xff]
    %v2278 = vld [vmem:[#allocation11 + $0x30] sm:$0xff]
    %v2279 = vld [vmem:[#allocation11 + $0x38] sm:$0xff]
    %v2280 = vld [vmem:[#allocation11 + $0x40] sm:$0xff]
    %v2281 = vld [vmem:[#allocation11 + $0x48] sm:$0xff]
    %v2282 = vld [vmem:[#allocation11 + $0x50] sm:$0xff]
    %v2283 = vld [vmem:[#allocation11 + $0x58] sm:$0xff]
    %v2284 = vld [vmem:[#allocation11 + $0x60] sm:$0xff]
    %v2285 = vld [vmem:[#allocation11 + $0x68] sm:$0xff]
    %v2286 = vld [vmem:[#allocation11 + $0x70] sm:$0xff]
    %v2287 = vld [vmem:[#allocation11 + $0x78] sm:$0xff]
    %v2288 = vld [vmem:[%s5] sm:$0x1]
    %v2290 = vlaneseq
    %v2291 = vshrl.u32 %v2290, 7
    %v2292 = vsub.s32 0, %v2291
    %v2293 = vrot.slane %v2288, %v2292
    %2295 = vmatprep.subr.mxu0 0.0
    %2296 = vmatpush1.msra.mxu0 %v2287
    %2297 = vmatprep.subr.mxu0 0.0
    %2298 = vmatpush1.msra.mxu0 %v2286
    %2299 = vmatprep.subr.mxu0 0.0
    %2300 = vmatpush1.msra.mxu0 %v2285
    %2301 = vmatprep.subr.mxu0 0.0
    %2302 = vmatpush1.msra.mxu0 %v2284
    %2303 = vmatprep.subr.mxu0 0.0
    %2304 = vmatpush1.msra.mxu0 %v2283
    %2305 = vmatprep.subr.mxu0 0.0
    %2306 = vmatpush1.msra.mxu0 %v2282
    %2307 = vmatprep.subr.mxu0 0.0
    %2308 = vmatpush1.msra.mxu0 %v2281
    %2309 = vmatprep.subr.mxu0 0.0
    %2310 = vmatpush1.msra.mxu0 %v2280
    %2311 = vmatprep.subr.mxu0 0.0
    %2312 = vmatpush1.msra.mxu0 %v2279
    %2313 = vmatprep.subr.mxu0 0.0
    %2314 = vmatpush1.msra.mxu0 %v2278
    %2315 = vmatprep.subr.mxu0 0.0
    %2316 = vmatpush1.msra.mxu0 %v2277
    %2317 = vmatprep.subr.mxu0 0.0
    %2318 = vmatpush1.msra.mxu0 %v2276
    %2319 = vmatprep.subr.mxu0 0.0
    %2320 = vmatpush1.msra.mxu0 %v2275
    %2321 = vmatprep.subr.mxu0 0.0
    %2322 = vmatpush1.msra.mxu0 %v2274
    %2323 = vmatprep.subr.mxu0 0.0
    %2324 = vmatpush1.msra.mxu0 %v2273
    %2325 = vmatprep.subr.mxu0 0.0
    %2326 = vmatpush1.msra.mxu0 %v2272
    %2327 = vmatprep.subr.mxu0 0.0
    %2328 = vmatpush2.msra.mxu0 0.0
    %2329 = vmatprep.subr.mxu0 0.0
    %2330 = vmatpush2.msra.mxu0 0.0
    %2331 = vmatprep.subr.mxu0 0.0
    %2332 = vmatpush2.msra.mxu0 0.0
    %2333 = vmatprep.subr.mxu0 0.0
    %2334 = vmatpush2.msra.mxu0 0.0
    %2335 = vmatprep.subr.mxu0 0.0
    %2336 = vmatpush2.msra.mxu0 0.0
    %2337 = vmatprep.subr.mxu0 0.0
    %2338 = vmatpush2.msra.mxu0 0.0
    %2339 = vmatprep.subr.mxu0 0.0
    %2340 = vmatpush2.msra.mxu0 0.0
    %2341 = vmatprep.subr.mxu0 0.0
    %2342 = vmatpush2.msra.mxu0 0.0
    %2343 = vmatprep.subr.mxu0 0.0
    %2344 = vmatpush2.msra.mxu0 0.0
    %2345 = vmatprep.subr.mxu0 0.0
    %2346 = vmatpush2.msra.mxu0 0.0
    %2347 = vmatprep.subr.mxu0 0.0
    %2348 = vmatpush2.msra.mxu0 0.0
    %2349 = vmatprep.subr.mxu0 0.0
    %2350 = vmatpush2.msra.mxu0 0.0
    %2351 = vmatprep.subr.mxu0 0.0
    %2352 = vmatpush2.msra.mxu0 0.0
    %2353 = vmatprep.subr.mxu0 0.0
    %2354 = vmatpush2.msra.mxu0 0.0
    %2355 = vmatprep.subr.mxu0 0.0
    %2356 = vmatpush2.msra.mxu0 0.0
    %2357 = vmatprep.subr.mxu0 0.0
    %2358 = vmatpush2.msra.mxu0 0.0
    %2359 = vmatprep.mubr.f32.mxu0 0.0
    %2360 = vmatmul.mubr.f32.gmra.mxu0 %v2270
    %v2361 = vpop.f32.mrf.mxu0
    %v2362 = vadd.f32 %v2293, %v2361
    %v2363 = vpop.f32.mrf.mxu0
    %2364 = vmatprep.mubr.f32.mxu0 0.0
    %2365 = vmatmul.mubr.f32.gmra.mxu0 %v2271
    %v2366 = vpop.f32.mrf.mxu0
    %v2367 = vadd.f32 %v2293, %v2366
    %v2368 = vpop.f32.mrf.mxu0
    %2369 = vdwg.mxu0
    %2370 = vst [vmem:[#allocation13] sm:$0xff] %v2362
    %2371 = vst [vmem:[#allocation13 + $0x8] sm:$0xff] %v2367
    // Predicated region
    $region46: #{tpu_custom_call.1} parent=1 // pred_check
      _
    $region47: #{tpu_custom_call.1} parent=1 // pred_check_branch
      %2373 = sbr.rel (0) target = $region49
    $region48: #{tpu_custom_call.1} parent=1 // pred_region
      %s2375 = ssub.s32 256, 256
      %2376 = vsyncadd [#allocation7], %s2375
      %s2377 = sshll.u32 [#allocation13], 4
      %s2378 = int_to_ptr.vmem [resolvable:$true] %s2377
      %2383 = dma.vmem_to_hbm [thread:$0]  %s2378, 256, %s6, [#allocation7], 128, 128, 8
    $region49: #{tpu_custom_call.1} parent=1 // pred_fallthru
      _
    // Predicated region
    $region50: #{tpu_custom_call.1} parent=1 // pred_check
      _
    $region51: #{tpu_custom_call.1} parent=1 // pred_check_branch
      %2385 = sbr.rel (0) target = $region53
    $region52: #{tpu_custom_call.1} parent=1 // pred_region
      %2386 = dma.done [#allocation7], 256
    $region53: #{tpu_custom_call.1} parent=1 // pred_fallthru
      _
    %2387 = vsyncpa [#allocation6], 1
    %2388 = vsyncpa [#allocation9], 1
    %2389 = vsyncpa [#allocation12], 1
    %2390 = vsyncpa [#allocation7], 1

</llo_original>
